<compile_context>
chip_gen: v5e
topology: v5e:2x2
jax: 0.10.0
libtpu: 0.0.40
codegen_flags: <defaults>
</compile_context>

<pallas_src>
import functools

import numpy as np

import jax
import jax.numpy as jnp
from jax import lax
from jax.experimental import pallas as pl
from jax.experimental.pallas import tpu as pltpu

BN_EPS = 1e-5
LANE = 128                      # lane-dense padded class width
VMEM_LIMIT = 32 * 1024 * 1024   # explicit scoped-VMEM budget (safe on v5e/v6e/v7x)


def _round_up(x, m):
    return -(-x // m) * m


# ---------------------------------------------------------------------------
# Fused Pallas kernel (B_blk images per grid step, grid marked "parallel")
# ---------------------------------------------------------------------------
def timmnet_fused_kernel(xcol_ref, w1_ref, s1_ref, w2_ref, s2_ref,
                         wh_ref, bh_ref, out_ref, y1p_ref, *, ho, wo):
    """conv1 -> conv2(stride 2) -> BN/ReLU -> global MAX pool -> linear head.

    xcol_ref : (B, 4*ho*wo, K1)          bf16  conv1 im2col, rows phase-ordered
    w1_ref   : (K1, C1)                  bf16  conv1 weight (BN scale folded)
    s1_ref   : (1, C1)                   f32   conv1 BN shift
    w2_ref   : (9*C1, C2)                bf16  conv2 weight, tap-stacked
    s2_ref   : (1, C2)                   f32   conv2 BN shift
    wh_ref   : (C2, NCLS_PAD)            bf16  classifier weight (zero padded)
    bh_ref   : (1, NCLS_PAD)             f32   classifier bias   (zero padded)
    out_ref  : (1, B, NCLS_PAD)          f32   logits
    y1p_ref  : (B, 4*(ho+1), wo+8, C1)   bf16  VMEM scratch, 4-phase padded y1
    """
    b, hw, k1 = xcol_ref.shape
    c1 = w1_ref.shape[1]
    c2 = w2_ref.shape[1]
    hq = ho + 1                       # rows per phase block (incl. zero border)

    # ---- conv1: one K-stacked matmul over the whole batch block ------------
    y1 = jnp.dot(xcol_ref[...].reshape(b * hw, k1), w1_ref[...],
                 preferred_element_type=jnp.float32)
    y1 = jnp.maximum(y1 + s1_ref[...], 0.0).astype(jnp.bfloat16)

    # ---- scatter conv1 output into the 4-phase padded VMEM scratch ---------
    # Phase (p, q) holds y1_padded[2n + p, 2m + q]; column-parity q=0 interiors
    # start at column 8 (border at column 7) so every store below is
    # sublane-ALIGNED; only some reads are offset (cheap, proven pattern).
    y1p_ref[...] = jnp.zeros(y1p_ref.shape, y1p_ref.dtype)
    y1 = y1.reshape(b, 4, ho * wo, c1)
    for p in range(2):
        for q in range(2):
            pq = 2 * p + q
            v = y1[:, pq, :, :].reshape(b, ho, wo, c1)
            r0 = pq * hq + (1 - p)
            c0 = 8 * (1 - q)
            y1p_ref[:, r0:r0 + ho, c0:c0 + wo, :] = v

    # ---- conv2 (stride 2): K-stack the 9 taps and do a single matmul -------
    taps = []
    for ki in range(3):
        for kj in range(3):
            pq = 2 * (ki % 2) + (kj % 2)
            r0 = pq * hq + ki // 2
            c0 = kj // 2 + (7 if kj % 2 == 0 else 0)
            win = y1p_ref[:, r0:r0 + ho, c0:c0 + wo, :]
            taps.append(win.reshape(b * ho * wo, c1))
    taps = jnp.concatenate(taps, axis=-1)                    # (B*ho*wo, 9*C1)
    y2 = jnp.dot(taps, w2_ref[...], preferred_element_type=jnp.float32)
    y2 = jnp.maximum(y2 + s2_ref[...], 0.0)                  # one epilogue pass

    # ---- global MAX pool + Dropout(eval: identity) + linear head -----------
    pooled = jnp.max(y2.reshape(b, ho * wo, c2), axis=1)     # (B, C2)
    logits = jnp.dot(pooled.astype(jnp.bfloat16), wh_ref[...],
                     preferred_element_type=jnp.float32) + bh_ref[...]
    out_ref[0] = logits


# ---------------------------------------------------------------------------
# pallas_call wrapper
# ---------------------------------------------------------------------------
def _fused_forward_pallas(xcol, w1, s1, w2, s2, wh, bh, *, b_blk, ho, wo):
    n, hw, k1 = xcol.shape
    c1 = w1.shape[1]
    c2 = w2.shape[1]
    ncp = wh.shape[1]
    n_blk = n // b_blk
    kern = functools.partial(timmnet_fused_kernel, ho=ho, wo=wo)
    out = pl.pallas_call(
        kern,
        out_shape=jax.ShapeDtypeStruct((n_blk, b_blk, ncp), jnp.float32),
        grid=(n_blk,),
        in_specs=[
            pl.BlockSpec((b_blk, hw, k1), lambda i: (i, 0, 0)),
            pl.BlockSpec((k1, c1), lambda i: (0, 0)),
            pl.BlockSpec((1, c1), lambda i: (0, 0)),
            pl.BlockSpec((9 * c1, c2), lambda i: (0, 0)),
            pl.BlockSpec((1, c2), lambda i: (0, 0)),
            pl.BlockSpec((c2, ncp), lambda i: (0, 0)),
            pl.BlockSpec((1, ncp), lambda i: (0, 0)),
        ],
        out_specs=pl.BlockSpec((1, b_blk, ncp), lambda i: (i, 0, 0)),
        scratch_shapes=[pltpu.VMEM((b_blk, 4 * (ho + 1), wo + 8, c1),
                                   jnp.bfloat16)],
        compiler_params=pltpu.CompilerParams(
            dimension_semantics=("parallel",),
            vmem_limit_bytes=VMEM_LIMIT),
    )(xcol, w1, s1, w2, s2, wh, bh)
    return out.reshape(n, ncp)


# ---------------------------------------------------------------------------
# Wrapper-side input prep (tiny input -> lane-dense K-stacked im2col)
# ---------------------------------------------------------------------------
def _phase_perm(h, w):
    """Row permutation putting conv1 output pixels in 4-phase (parity) order."""
    ho, wo = h // 2, w // 2
    perm = np.empty(h * w, dtype=np.int32)
    t = 0
    for p in range(2):
        for q in range(2):
            for i in range(ho):
                for j in range(wo):
                    r = 2 * i + 1 - p
                    c = 2 * j + 1 - q
                    perm[t] = r * w + c
                    t += 1
    return perm


def _build_conv1_im2col(x_nhwc, perm, k1):
    """3x3 im2col of the (tiny) input; rows phase-ordered, K padded to k1."""
    n, h, w, cin = x_nhwc.shape
    xp = jnp.pad(x_nhwc, ((0, 0), (1, 1), (1, 1), (0, 0)))
    taps = [xp[:, ki:ki + h, kj:kj + w, :]
            for ki in range(3) for kj in range(3)]
    xcol = jnp.concatenate(taps, axis=-1).reshape(n, h * w, 9 * cin)
    xcol = xcol[:, perm, :]                          # phase-order the rows
    xcol = jnp.pad(xcol, ((0, 0), (0, 0), (0, k1 - 9 * cin)))
    return xcol.astype(jnp.bfloat16)


def _pick_batch_block(n):
    """Largest divisor of n that is <= 8, preferring a grid length >= 2 so
    both TensorCores stay busy on dual-TC (v7x) chips."""
    divs = [d for d in range(1, min(n, 8) + 1) if n % d == 0]
    multi = [d for d in divs if n // d >= 2]
    return max(multi) if multi else max(divs)


# ---------------------------------------------------------------------------
# Parameter prep (one-time, outside the per-step path)
# ---------------------------------------------------------------------------
def _fold_bn(w, gamma, beta, mean, var):
    """Eval-mode BN folded into the conv: y = conv(x, w*scale) + shift."""
    scale = gamma * lax.rsqrt(var + BN_EPS)
    return w * scale, beta - mean * scale


def prepare_params(p):
    """Fold BN into the conv weights, stack conv taps along K, pad the head to
    a lane-dense width and cast all MXU operands to bf16."""
    cin, c1 = p["conv1_w"].shape[2], p["conv1_w"].shape[3]
    c2 = p["conv2_w"].shape[3]
    ncls = p["head_w"].shape[1]
    k1 = _round_up(9 * cin, 8)
    ncp = _round_up(max(ncls, LANE), LANE)

    w1, shift1 = _fold_bn(p["conv1_w"], p["bn1_gamma"], p["bn1_beta"],
                          p["bn1_mean"], p["bn1_var"])
    w2, shift2 = _fold_bn(p["conv2_w"], p["bn2_gamma"], p["bn2_beta"],
                          p["bn2_mean"], p["bn2_var"])
    w1s = jnp.pad(w1.reshape(9 * cin, c1), ((0, k1 - 9 * cin), (0, 0)))
    wh = jnp.pad(p["head_w"], ((0, 0), (0, ncp - ncls)))
    bh = jnp.pad(p["head_b"], (0, ncp - ncls))
    return {
        "w1": w1s.astype(jnp.bfloat16),
        "shift1": shift1[None, :].astype(jnp.float32),
        "w2": w2.reshape(9 * c1, c2).astype(jnp.bfloat16),
        "shift2": shift2[None, :].astype(jnp.float32),
        "wh": wh.astype(jnp.bfloat16),
        "bh": bh[None, :].astype(jnp.float32),
    }


# ---------------------------------------------------------------------------
# Forward pass
# ---------------------------------------------------------------------------
@functools.partial(jax.jit, static_argnames=("num_classes",))
def timmnet_forward(x_nchw, kp, num_classes=10):
    """Eval-mode TimmNet forward: NCHW float32 -> (N, num_classes) logits."""
    n, cin, h, w = x_nchw.shape
    assert h % 2 == 0 and w % 2 == 0, "toy wrapper assumes even spatial dims"
    ho, wo = h // 2, w // 2
    assert (ho * wo) % 8 == 0
    k1 = kp["w1"].shape[0]

    x = jnp.transpose(x_nchw, (0, 2, 3, 1))          # NHWC, channels on lanes
    xcol = _build_conv1_im2col(x, _phase_perm(h, w), k1)
    logits = _fused_forward_pallas(
        xcol, kp["w1"], kp["shift1"], kp["w2"], kp["shift2"],
        kp["wh"], kp["bh"], b_blk=_pick_batch_block(n), ho=ho, wo=wo)
    return logits[:, :num_classes]


# ---------------------------------------------------------------------------
# Parameters + pure-JAX reference (correctness check for the kernel)
# ---------------------------------------------------------------------------
def init_params(key, in_chans=3, c1=32, c2=64, num_classes=10):
    ks = jax.random.split(key, 12)
    nrm = lambda k, s, sc=1.0: sc * jax.random.normal(k, s, jnp.float32)
    return {
        "conv1_w": nrm(ks[0], (3, 3, in_chans, c1), 0.1),
        "bn1_gamma": 1.0 + nrm(ks[1], (c1,), 0.05),
        "bn1_beta": nrm(ks[2], (c1,), 0.05),
        "bn1_mean": nrm(ks[3], (c1,), 0.1),
        "bn1_var": 1.0 + 0.2 * jax.random.uniform(ks[4], (c1,), jnp.float32),
        "conv2_w": nrm(ks[5], (3, 3, c1, c2), 0.1),
        "bn2_gamma": 1.0 + nrm(ks[6], (c2,), 0.05),
        "bn2_beta": nrm(ks[7], (c2,), 0.05),
        "bn2_mean": nrm(ks[8], (c2,), 0.1),
        "bn2_var": 1.0 + 0.2 * jax.random.uniform(ks[9], (c2,), jnp.float32),
        "head_w": nrm(ks[10], (c2, num_classes), 0.1),
        "head_b": nrm(ks[11], (num_classes,), 0.05),
    }


def reference_forward(x_nchw, p):
    """Pure-JAX reference with matching bf16 operand quantization."""
    q = lambda a: a.astype(jnp.bfloat16).astype(jnp.float32)

    def conv_bn_relu(x, w, gamma, beta, mean, var, stride):
        scale = gamma * lax.rsqrt(var + BN_EPS)
        y = lax.conv_general_dilated(
            q(x), q(w * scale), window_strides=(stride, stride),
            padding=((1, 1), (1, 1)),
            dimension_numbers=("NHWC", "HWIO", "NHWC"),
            precision=lax.Precision.HIGHEST)
        return jnp.maximum(y + (beta - mean * scale), 0.0)

    x = jnp.transpose(x_nchw, (0, 2, 3, 1))
    y1 = conv_bn_relu(x, p["conv1_w"], p["bn1_gamma"], p["bn1_beta"],
                      p["bn1_mean"], p["bn1_var"], 1)
    y2 = conv_bn_relu(y1, p["conv2_w"], p["bn2_gamma"], p["bn2_beta"],
                      p["bn2_mean"], p["bn2_var"], 2)
    pooled = jnp.max(y2, axis=(1, 2))                 # global 'max' pool
    # Dropout(p=0.3) before the head is identity in eval mode.
    return q(pooled) @ q(p["head_w"]) + p["head_b"]


if __name__ == "__main__":
    key = jax.random.PRNGKey(0)
    k_x, k_p = jax.random.split(key)

    # Small shapes consistent with the module: batch=2, in_chans=3, 16x16 input.
    x = jax.random.normal(k_x, (2, 3, 16, 16), jnp.float32)   # NCHW like PyTorch
    params = init_params(k_p, in_chans=3, c1=32, c2=64, num_classes=10)
    kparams = prepare_params(params)

    logits = timmnet_forward(x, kparams, num_classes=10)
    jax.block_until_ready(logits)

    assert logits.shape == (2, 10), logits.shape
    assert logits.dtype == jnp.float32
    assert bool(jnp.all(jnp.isfinite(logits)))

    ref = reference_forward(x, params)
    err = float(jnp.max(jnp.abs(logits - ref)))
    assert err < 5e-2, f"max |kernel - reference| = {err}"
    print("KERNEL_OK")
</pallas_src>

<mosaic_0001>
module attributes {stable_mosaic.version = 11 : i64} {
  func.func @timmnet_fused_kernel(%arg0: i32, %arg1: memref<1x256x32xbf16, #tpu.memory_space<vmem>>, %arg2: memref<32x32xbf16, #tpu.memory_space<vmem>>, %arg3: memref<1x32xf32, #tpu.memory_space<vmem>>, %arg4: memref<288x64xbf16, #tpu.memory_space<vmem>>, %arg5: memref<1x64xf32, #tpu.memory_space<vmem>>, %arg6: memref<64x128xbf16, #tpu.memory_space<vmem>>, %arg7: memref<1x128xf32, #tpu.memory_space<vmem>>, %arg8: memref<1x1x128xf32, #tpu.memory_space<vmem>>, %arg9: memref<1x36x16x32xbf16, #tpu.memory_space<vmem>>) attributes {dimension_semantics = [#tpu.dimension_semantics<parallel>], iteration_bounds = array<i64: 2>, scalar_prefetch = 0 : i64, scratch_operands = 1 : i64, tpu.core_type = #tpu.core_type<tc>, window_params = [{transform_indices = @transform_0, window_bounds = array<i64: 1, 256, 32>}, {pipeline_mode = #tpu.pipeline_mode<synchronous>, transform_indices = @transform_1, window_bounds = array<i64: 32, 32>}, {pipeline_mode = #tpu.pipeline_mode<synchronous>, transform_indices = @transform_2, window_bounds = array<i64: 1, 32>}, {pipeline_mode = #tpu.pipeline_mode<synchronous>, transform_indices = @transform_3, window_bounds = array<i64: 288, 64>}, {pipeline_mode = #tpu.pipeline_mode<synchronous>, transform_indices = @transform_4, window_bounds = array<i64: 1, 64>}, {pipeline_mode = #tpu.pipeline_mode<synchronous>, transform_indices = @transform_5, window_bounds = array<i64: 64, 128>}, {pipeline_mode = #tpu.pipeline_mode<synchronous>, transform_indices = @transform_6, window_bounds = array<i64: 1, 128>}, {transform_indices = @transform_7, window_bounds = array<i64: 1, 1, 128>}]} {
    %c0 = arith.constant 0 : index
    %c0_0 = arith.constant 0 : index
    %c0_1 = arith.constant 0 : index
    %0 = vector.load %arg1[%c0, %c0_0, %c0_1] : memref<1x256x32xbf16, #tpu.memory_space<vmem>>, vector<1x256x32xbf16>
    %1 = vector.shape_cast %0 : vector<1x256x32xbf16> to vector<256x32xbf16>
    %c0_2 = arith.constant 0 : index
    %c0_3 = arith.constant 0 : index
    %2 = vector.load %arg2[%c0_2, %c0_3] : memref<32x32xbf16, #tpu.memory_space<vmem>>, vector<32x32xbf16>
    %cst = arith.constant dense<0.000000e+00> : vector<256x32xf32>
    %3 = tpu.matmul %1, %2, %cst {dimension_numbers = #tpu.dot_dimension_numbers<[1], [0], [0], [1], [0, 0, 1, 1], [], []>} : vector<256x32xbf16>, vector<32x32xbf16>, vector<256x32xf32> -> vector<256x32xf32>
    %c0_4 = arith.constant 0 : index
    %c0_5 = arith.constant 0 : index
    %4 = vector.load %arg3[%c0_4, %c0_5] : memref<1x32xf32, #tpu.memory_space<vmem>>, vector<1x32xf32>
    %5 = vector.broadcast %4 : vector<1x32xf32> to vector<256x32xf32>
    %6 = arith.addf %3, %5 : vector<256x32xf32>
    %cst_6 = arith.constant 0.000000e+00 : f32
    %7 = vector.broadcast %cst_6 : f32 to vector<256x32xf32>
    %8 = arith.maximumf %6, %7 : vector<256x32xf32>
    %9 = arith.truncf %8 : vector<256x32xf32> to vector<256x32xbf16>
    %cst_7 = arith.constant 0.000000e+00 : bf16
    %10 = vector.broadcast %cst_7 : bf16 to vector<1x36x16x32xbf16>
    %c0_8 = arith.constant 0 : index
    %c0_9 = arith.constant 0 : index
    %c0_10 = arith.constant 0 : index
    %c0_11 = arith.constant 0 : index
    %11 = vector.load %arg9[%c0_8, %c0_9, %c0_10, %c0_11] : memref<1x36x16x32xbf16, #tpu.memory_space<vmem>>, vector<1x36x16x32xbf16>
    tpu.vector_store %arg9[%c0_8, %c0_9, %c0_10, %c0_11], %10 {strides = array<i32>} : memref<1x36x16x32xbf16, #tpu.memory_space<vmem>>, vector<1x36x16x32xbf16>,
    %12 = vector.shape_cast %9 : vector<256x32xbf16> to vector<1x4x64x32xbf16>
    %13 = vector.extract_strided_slice %12 {offsets = [0, 0, 0, 0], sizes = [1, 1, 64, 32], strides = [1, 1, 1, 1]} : vector<1x4x64x32xbf16> to vector<1x1x64x32xbf16>
    %14 = vector.shape_cast %13 : vector<1x1x64x32xbf16> to vector<1x64x32xbf16>
    %15 = vector.shape_cast %14 : vector<1x64x32xbf16> to vector<1x8x8x32xbf16>
    %c0_12 = arith.constant 0 : index
    %c1 = arith.constant 1 : index
    %c8 = arith.constant 8 : index
    %c0_13 = arith.constant 0 : index
    %16 = vector.load %arg9[%c0_12, %c1, %c8, %c0_13] : memref<1x36x16x32xbf16, #tpu.memory_space<vmem>>, vector<1x8x8x32xbf16>
    tpu.vector_store %arg9[%c0_12, %c1, %c8, %c0_13], %15 {strides = array<i32>} : memref<1x36x16x32xbf16, #tpu.memory_space<vmem>>, vector<1x8x8x32xbf16>,
    %17 = vector.extract_strided_slice %12 {offsets = [0, 1, 0, 0], sizes = [1, 1, 64, 32], strides = [1, 1, 1, 1]} : vector<1x4x64x32xbf16> to vector<1x1x64x32xbf16>
    %18 = vector.shape_cast %17 : vector<1x1x64x32xbf16> to vector<1x64x32xbf16>
    %19 = vector.shape_cast %18 : vector<1x64x32xbf16> to vector<1x8x8x32xbf16>
    %c0_14 = arith.constant 0 : index
    %c10 = arith.constant 10 : index
    %c0_15 = arith.constant 0 : index
    %c0_16 = arith.constant 0 : index
    %20 = vector.load %arg9[%c0_14, %c10, %c0_15, %c0_16] : memref<1x36x16x32xbf16, #tpu.memory_space<vmem>>, vector<1x8x8x32xbf16>
    tpu.vector_store %arg9[%c0_14, %c10, %c0_15, %c0_16], %19 {strides = array<i32>} : memref<1x36x16x32xbf16, #tpu.memory_space<vmem>>, vector<1x8x8x32xbf16>,
    %21 = vector.extract_strided_slice %12 {offsets = [0, 2, 0, 0], sizes = [1, 1, 64, 32], strides = [1, 1, 1, 1]} : vector<1x4x64x32xbf16> to vector<1x1x64x32xbf16>
    %22 = vector.shape_cast %21 : vector<1x1x64x32xbf16> to vector<1x64x32xbf16>
    %23 = vector.shape_cast %22 : vector<1x64x32xbf16> to vector<1x8x8x32xbf16>
    %c0_17 = arith.constant 0 : index
    %c18 = arith.constant 18 : index
    %c8_18 = arith.constant 8 : index
    %c0_19 = arith.constant 0 : index
    %24 = vector.load %arg9[%c0_17, %c18, %c8_18, %c0_19] : memref<1x36x16x32xbf16, #tpu.memory_space<vmem>>, vector<1x8x8x32xbf16>
    tpu.vector_store %arg9[%c0_17, %c18, %c8_18, %c0_19], %23 {strides = array<i32>} : memref<1x36x16x32xbf16, #tpu.memory_space<vmem>>, vector<1x8x8x32xbf16>,
    %25 = vector.extract_strided_slice %12 {offsets = [0, 3, 0, 0], sizes = [1, 1, 64, 32], strides = [1, 1, 1, 1]} : vector<1x4x64x32xbf16> to vector<1x1x64x32xbf16>
    %26 = vector.shape_cast %25 : vector<1x1x64x32xbf16> to vector<1x64x32xbf16>
    %27 = vector.shape_cast %26 : vector<1x64x32xbf16> to vector<1x8x8x32xbf16>
    %c0_20 = arith.constant 0 : index
    %c27 = arith.constant 27 : index
    %c0_21 = arith.constant 0 : index
    %c0_22 = arith.constant 0 : index
    %28 = vector.load %arg9[%c0_20, %c27, %c0_21, %c0_22] : memref<1x36x16x32xbf16, #tpu.memory_space<vmem>>, vector<1x8x8x32xbf16>
    tpu.vector_store %arg9[%c0_20, %c27, %c0_21, %c0_22], %27 {strides = array<i32>} : memref<1x36x16x32xbf16, #tpu.memory_space<vmem>>, vector<1x8x8x32xbf16>,
    %c0_23 = arith.constant 0 : index
    %c0_24 = arith.constant 0 : index
    %c7 = arith.constant 7 : index
    %c0_25 = arith.constant 0 : index
    %29 = vector.load %arg9[%c0_23, %c0_24, %c7, %c0_25] : memref<1x36x16x32xbf16, #tpu.memory_space<vmem>>, vector<1x8x8x32xbf16>
    %30 = vector.shape_cast %29 : vector<1x8x8x32xbf16> to vector<64x32xbf16>
    %c0_26 = arith.constant 0 : index
    %c9 = arith.constant 9 : index
    %c0_27 = arith.constant 0 : index
    %c0_28 = arith.constant 0 : index
    %31 = vector.load %arg9[%c0_26, %c9, %c0_27, %c0_28] : memref<1x36x16x32xbf16, #tpu.memory_space<vmem>>, vector<1x8x8x32xbf16>
    %32 = vector.shape_cast %31 : vector<1x8x8x32xbf16> to vector<64x32xbf16>
    %c0_29 = arith.constant 0 : index
    %c0_30 = arith.constant 0 : index
    %c8_31 = arith.constant 8 : index
    %c0_32 = arith.constant 0 : index
    %33 = vector.load %arg9[%c0_29, %c0_30, %c8_31, %c0_32] : memref<1x36x16x32xbf16, #tpu.memory_space<vmem>>, vector<1x8x8x32xbf16>
    %34 = vector.shape_cast %33 : vector<1x8x8x32xbf16> to vector<64x32xbf16>
    %c0_33 = arith.constant 0 : index
    %c18_34 = arith.constant 18 : index
    %c7_35 = arith.constant 7 : index
    %c0_36 = arith.constant 0 : index
    %35 = vector.load %arg9[%c0_33, %c18_34, %c7_35, %c0_36] : memref<1x36x16x32xbf16, #tpu.memory_space<vmem>>, vector<1x8x8x32xbf16>
    %36 = vector.shape_cast %35 : vector<1x8x8x32xbf16> to vector<64x32xbf16>
    %c0_37 = arith.constant 0 : index
    %c27_38 = arith.constant 27 : index
    %c0_39 = arith.constant 0 : index
    %c0_40 = arith.constant 0 : index
    %37 = vector.load %arg9[%c0_37, %c27_38, %c0_39, %c0_40] : memref<1x36x16x32xbf16, #tpu.memory_space<vmem>>, vector<1x8x8x32xbf16>
    %38 = vector.shape_cast %37 : vector<1x8x8x32xbf16> to vector<64x32xbf16>
    %c0_41 = arith.constant 0 : index
    %c18_42 = arith.constant 18 : index
    %c8_43 = arith.constant 8 : index
    %c0_44 = arith.constant 0 : index
    %39 = vector.load %arg9[%c0_41, %c18_42, %c8_43, %c0_44] : memref<1x36x16x32xbf16, #tpu.memory_space<vmem>>, vector<1x8x8x32xbf16>
    %40 = vector.shape_cast %39 : vector<1x8x8x32xbf16> to vector<64x32xbf16>
    %c0_45 = arith.constant 0 : index
    %c1_46 = arith.constant 1 : index
    %c7_47 = arith.constant 7 : index
    %c0_48 = arith.constant 0 : index
    %41 = vector.load %arg9[%c0_45, %c1_46, %c7_47, %c0_48] : memref<1x36x16x32xbf16, #tpu.memory_space<vmem>>, vector<1x8x8x32xbf16>
    %42 = vector.shape_cast %41 : vector<1x8x8x32xbf16> to vector<64x32xbf16>
    %c0_49 = arith.constant 0 : index
    %c10_50 = arith.constant 10 : index
    %c0_51 = arith.constant 0 : index
    %c0_52 = arith.constant 0 : index
    %43 = vector.load %arg9[%c0_49, %c10_50, %c0_51, %c0_52] : memref<1x36x16x32xbf16, #tpu.memory_space<vmem>>, vector<1x8x8x32xbf16>
    %44 = vector.shape_cast %43 : vector<1x8x8x32xbf16> to vector<64x32xbf16>
    %c0_53 = arith.constant 0 : index
    %c1_54 = arith.constant 1 : index
    %c8_55 = arith.constant 8 : index
    %c0_56 = arith.constant 0 : index
    %45 = vector.load %arg9[%c0_53, %c1_54, %c8_55, %c0_56] : memref<1x36x16x32xbf16, #tpu.memory_space<vmem>>, vector<1x8x8x32xbf16>
    %46 = vector.shape_cast %45 : vector<1x8x8x32xbf16> to vector<64x32xbf16>
    %47 = tpu.concatenate %30, %32, %34, %36, %38, %40, %42, %44, %46 in 1 : vector<64x32xbf16>, vector<64x32xbf16>, vector<64x32xbf16>, vector<64x32xbf16>, vector<64x32xbf16>, vector<64x32xbf16>, vector<64x32xbf16>, vector<64x32xbf16>, vector<64x32xbf16> -> vector<64x288xbf16>
    %c0_57 = arith.constant 0 : index
    %c0_58 = arith.constant 0 : index
    %48 = vector.load %arg4[%c0_57, %c0_58] : memref<288x64xbf16, #tpu.memory_space<vmem>>, vector<288x64xbf16>
    %cst_59 = arith.constant dense<0.000000e+00> : vector<64x64xf32>
    %49 = tpu.matmul %47, %48, %cst_59 {dimension_numbers = #tpu.dot_dimension_numbers<[1], [0], [0], [1], [0, 0, 1, 1], [], []>} : vector<64x288xbf16>, vector<288x64xbf16>, vector<64x64xf32> -> vector<64x64xf32>
    %c0_60 = arith.constant 0 : index
    %c0_61 = arith.constant 0 : index
    %50 = vector.load %arg5[%c0_60, %c0_61] : memref<1x64xf32, #tpu.memory_space<vmem>>, vector<1x64xf32>
    %51 = vector.broadcast %50 : vector<1x64xf32> to vector<64x64xf32>
    %52 = arith.addf %49, %51 : vector<64x64xf32>
    %cst_62 = arith.constant 0.000000e+00 : f32
    %53 = vector.broadcast %cst_62 : f32 to vector<64x64xf32>
    %54 = arith.maximumf %52, %53 : vector<64x64xf32>
    %55 = vector.shape_cast %54 : vector<64x64xf32> to vector<1x64x64xf32>
    %cst_63 = arith.constant dense<0xFF800000> : vector<1x64xf32>
    %56 = vector.multi_reduction <maximumf>, %55, %cst_63 [1] : vector<1x64x64xf32> to vector<1x64xf32>
    %57 = arith.truncf %56 : vector<1x64xf32> to vector<1x64xbf16>
    %c0_64 = arith.constant 0 : index
    %c0_65 = arith.constant 0 : index
    %58 = vector.load %arg6[%c0_64, %c0_65] : memref<64x128xbf16, #tpu.memory_space<vmem>>, vector<64x128xbf16>
    %cst_66 = arith.constant dense<0.000000e+00> : vector<1x128xf32>
    %59 = tpu.matmul %57, %58, %cst_66 {dimension_numbers = #tpu.dot_dimension_numbers<[1], [0], [0], [1], [0, 0, 1, 1], [], []>} : vector<1x64xbf16>, vector<64x128xbf16>, vector<1x128xf32> -> vector<1x128xf32>
    %c0_67 = arith.constant 0 : index
    %c0_68 = arith.constant 0 : index
    %60 = vector.load %arg7[%c0_67, %c0_68] : memref<1x128xf32, #tpu.memory_space<vmem>>, vector<1x128xf32>
    %61 = arith.addf %59, %60 : vector<1x128xf32>
    %c0_69 = arith.constant 0 : index
    %c0_70 = arith.constant 0 : index
    %c0_71 = arith.constant 0 : index
    %62 = vector.load %arg8[%c0_69, %c0_70, %c0_71] : memref<1x1x128xf32, #tpu.memory_space<vmem>>, vector<1x1x128xf32>
    %63 = vector.shape_cast %62 : vector<1x1x128xf32> to vector<1x128xf32>
    %64 = vector.shape_cast %61 : vector<1x128xf32> to vector<1x1x128xf32>
    tpu.vector_store %arg8[%c0_69, %c0_70, %c0_71], %64 {strides = array<i32>} : memref<1x1x128xf32, #tpu.memory_space<vmem>>, vector<1x1x128xf32>,
    return
  }
  func.func @transform_0(%arg0: i32) -> (i32, i32, i32) {
    %c0_i32 = arith.constant 0 : i32
    %c0_i32_0 = arith.constant 0 : i32
    %c0_i32_1 = arith.constant 0 : i32
    return %arg0, %c0_i32, %c0_i32_0 : i32, i32, i32
  }
  func.func @transform_1(%arg0: i32) -> (i32, i32) {
    %c0_i32 = arith.constant 0 : i32
    %c0_i32_0 = arith.constant 0 : i32
    %c0_i32_1 = arith.constant 0 : i32
    return %c0_i32, %c0_i32_0 : i32, i32
  }
  func.func @transform_2(%arg0: i32) -> (i32, i32) {
    %c0_i32 = arith.constant 0 : i32
    %c0_i32_0 = arith.constant 0 : i32
    %c0_i32_1 = arith.constant 0 : i32
    return %c0_i32, %c0_i32_0 : i32, i32
  }
  func.func @transform_3(%arg0: i32) -> (i32, i32) {
    %c0_i32 = arith.constant 0 : i32
    %c0_i32_0 = arith.constant 0 : i32
    %c0_i32_1 = arith.constant 0 : i32
    return %c0_i32, %c0_i32_0 : i32, i32
  }
  func.func @transform_4(%arg0: i32) -> (i32, i32) {
    %c0_i32 = arith.constant 0 : i32
    %c0_i32_0 = arith.constant 0 : i32
    %c0_i32_1 = arith.constant 0 : i32
    return %c0_i32, %c0_i32_0 : i32, i32
  }
  func.func @transform_5(%arg0: i32) -> (i32, i32) {
    %c0_i32 = arith.constant 0 : i32
    %c0_i32_0 = arith.constant 0 : i32
    %c0_i32_1 = arith.constant 0 : i32
    return %c0_i32, %c0_i32_0 : i32, i32
  }
  func.func @transform_6(%arg0: i32) -> (i32, i32) {
    %c0_i32 = arith.constant 0 : i32
    %c0_i32_0 = arith.constant 0 : i32
    %c0_i32_1 = arith.constant 0 : i32
    return %c0_i32, %c0_i32_0 : i32, i32
  }
  func.func @transform_7(%arg0: i32) -> (i32, i32, i32) {
    %c0_i32 = arith.constant 0 : i32
    %c0_i32_0 = arith.constant 0 : i32
    %c0_i32_1 = arith.constant 0 : i32
    return %arg0, %c0_i32, %c0_i32_0 : i32, i32, i32
  }
}

</mosaic_0001>

<llo_original>
// kernel: timmnet_forward.1
$region0: #{timmnet_forward.1}
  #allocation0 [shape = 'u32[]', space=smem, size = 0x4, offset = 0x4, fixed_abs, tag = 'smem constant byte address 0x4 - core index']
  #allocation1 [shape = 'u32[72,128]{1,0:T(1,128)}', space=vmem, size = 0x9000, scoped, tag = 'internal scratch']
  #allocation2 [shape = 'bf16[1,36,16,32]{3,2,1,0:T(8,128)(2,1)}', space=vmem, size = 0x24000, scoped, tag = 'scratch operand']
  %s0 = inlined_call_operand.vmem [shape: bf16[2,256,32], index: 0, kind: input, shape index: {}]
  %s1 = inlined_call_operand.vmem [shape: bf16[32,32], index: 1, kind: input, shape index: {}]
  %s2 = inlined_call_operand.vmem [shape: f32[1,32], index: 2, kind: input, shape index: {}]
  %s3 = inlined_call_operand.vmem [shape: bf16[288,64], index: 3, kind: input, shape index: {}]
  %s4 = inlined_call_operand.vmem [shape: f32[1,64], index: 4, kind: input, shape index: {}]
  %s5 = inlined_call_operand.vmem [shape: bf16[64,128], index: 5, kind: input, shape index: {}]
  %s6 = inlined_call_operand.vmem [shape: f32[1,128], index: 6, kind: input, shape index: {}]
  %s7 = inlined_call_operand.hbm [shape: f32[2,1,128], index: 7, kind: output, shape index: {}]
  %s8 = sld [smem:[#allocation0]]
  $region61: #{timmnet_forward.1} parent=0
    _
  %s10 = ssub.s32 1, %s8
  %s11 = scalar_select 0, %s10, %s8
  $region1: #{timmnet_forward.1} parent=0
    #allocation3 [shape = 'u8[1024]{0}', space=vmem, size = 0x400, scoped, tag = 'output window, operand 0']
    #allocation4 [shape = 's32[2]{0}', space=sflag, size = 0x8, scoped, tag = 'scoped memory for timmnet_forward.1']
    %12 = vsyncpa [#allocation4], 0
    %s13 = scalar_lea.sflag [#allocation4], 1
    %14 = vsyncpa %s13, 0
    loop: start=0, step=1, limit=4
    $region2: #{timmnet_forward.1} parent=1 // loop_pre_header
      _
    $region3: #{timmnet_forward.1} parent=1 // loop_header
      %s16 = sphi 0, %s20
      %p17 = scmp.ge.s32.totalorder %s16, 4
      %s26 = sphi 0, %s28
      %s29 = sphi 0, %s26
      %s30 = sphi 0, %s29
      %s46 = sphi 0, %s30
      %s50 = sphi 0, %s50
      %s52 = sphi 0, %s50
      %s53 = sphi 0, %s52
      %s67 = sphi 0, %s53
      %s71 = sphi 0, %s71
      %s73 = sphi 0, %s71
      %s74 = sphi 0, %s73
      %s88 = sphi 0, %s74
      %s92 = sphi 0, %s92
      %s94 = sphi 0, %s92
      %s95 = sphi 0, %s94
      %s109 = sphi 0, %s95
      %s113 = sphi 0, %s113
      %s115 = sphi 0, %s113
      %s116 = sphi 0, %s115
      %s130 = sphi 0, %s116
      %s134 = sphi 0, %s134
      %s136 = sphi 0, %s134
      %s137 = sphi 0, %s136
      %s151 = sphi 0, %s137
      %s155 = sphi 0, %s155
      %s157 = sphi 0, %s155
      %s158 = sphi 0, %s157
      %s172 = sphi 0, %s158
      %s178 = sphi 0, %s180
      %s181 = sphi 0, %s178
      %s182 = sphi 0, %s181
      %s198 = sphi 0, %s182
    $region4: #{timmnet_forward.1} parent=1 // loop_header_branch
      %19 = sbr.rel (%p17) target = $region8
    $region5: #{timmnet_forward.1} parent=1 // loop_body
      %s21 = ssub.s32 %s16, 1
      %s22 = ssub.s32 %s16, 2
      %s23 = sadd.s32 %s16, 1
      %s24 = ssub.s32 %s16, %s23
      %p25 = scmp.eq.s32.totalorder %s24, 0
      %s27 = sadd.s32 %s26, 1
      %s28 = scalar_select %p25, %s26, %s27
      %p31 = pneg %p25
      %p32 = scmp.eq.s32.totalorder %s16, 1
      %p33 = por %p31, %p32
      %p34 = scmp.ne.s32.totalorder %s26, %s29
      %p35 = scmp.eq.s32.totalorder %s16, 0
      %p36 = por %p34, %p35
      %p37 = scmp.ne.s32.totalorder %s26, %s29
      %p38 = scmp.eq.s32.totalorder %s21, 1
      %p39 = por %p37, %p38
      %p40 = scmp.ne.s32.totalorder %s29, %s30
      %p41 = scmp.eq.s32.totalorder %s21, 0
      %p42 = por %p40, %p41
      %p43 = scmp.ne.s32.totalorder %s29, %s30
      %p44 = scmp.eq.s32.totalorder %s22, 1
      %p45 = por %p43, %p44
      %p47 = scmp.ne.s32.totalorder %s30, %s46
      %p48 = scmp.eq.s32.totalorder %s22, 0
      %p49 = por %p47, %p48
      %s51 = sadd.s32 %s50, 1
      %p54 = scmp.eq.s32.totalorder %s16, 1
      %p55 = scmp.ne.s32.totalorder %s50, %s52
      %p56 = scmp.eq.s32.totalorder %s16, 0
      %p57 = por %p55, %p56
      %p58 = scmp.ne.s32.totalorder %s50, %s52
      %p59 = scmp.eq.s32.totalorder %s21, 1
      %p60 = por %p58, %p59
      %p61 = scmp.ne.s32.totalorder %s52, %s53
      %p62 = scmp.eq.s32.totalorder %s21, 0
      %p63 = por %p61, %p62
      %p64 = scmp.ne.s32.totalorder %s52, %s53
      %p65 = scmp.eq.s32.totalorder %s22, 1
      %p66 = por %p64, %p65
      %p68 = scmp.ne.s32.totalorder %s53, %s67
      %p69 = scmp.eq.s32.totalorder %s22, 0
      %p70 = por %p68, %p69
      %s72 = sadd.s32 %s71, 1
      %p75 = scmp.eq.s32.totalorder %s16, 1
      %p76 = scmp.ne.s32.totalorder %s71, %s73
      %p77 = scmp.eq.s32.totalorder %s16, 0
      %p78 = por %p76, %p77
      %p79 = scmp.ne.s32.totalorder %s71, %s73
      %p80 = scmp.eq.s32.totalorder %s21, 1
      %p81 = por %p79, %p80
      %p82 = scmp.ne.s32.totalorder %s73, %s74
      %p83 = scmp.eq.s32.totalorder %s21, 0
      %p84 = por %p82, %p83
      %p85 = scmp.ne.s32.totalorder %s73, %s74
      %p86 = scmp.eq.s32.totalorder %s22, 1
      %p87 = por %p85, %p86
      %p89 = scmp.ne.s32.totalorder %s74, %s88
      %p90 = scmp.eq.s32.totalorder %s22, 0
      %p91 = por %p89, %p90
      %s93 = sadd.s32 %s92, 1
      %p96 = scmp.eq.s32.totalorder %s16, 1
      %p97 = scmp.ne.s32.totalorder %s92, %s94
      %p98 = scmp.eq.s32.totalorder %s16, 0
      %p99 = por %p97, %p98
      %p100 = scmp.ne.s32.totalorder %s92, %s94
      %p101 = scmp.eq.s32.totalorder %s21, 1
      %p102 = por %p100, %p101
      %p103 = scmp.ne.s32.totalorder %s94, %s95
      %p104 = scmp.eq.s32.totalorder %s21, 0
      %p105 = por %p103, %p104
      %p106 = scmp.ne.s32.totalorder %s94, %s95
      %p107 = scmp.eq.s32.totalorder %s22, 1
      %p108 = por %p106, %p107
      %p110 = scmp.ne.s32.totalorder %s95, %s109
      %p111 = scmp.eq.s32.totalorder %s22, 0
      %p112 = por %p110, %p111
      %s114 = sadd.s32 %s113, 1
      %p117 = scmp.eq.s32.totalorder %s16, 1
      %p118 = scmp.ne.s32.totalorder %s113, %s115
      %p119 = scmp.eq.s32.totalorder %s16, 0
      %p120 = por %p118, %p119
      %p121 = scmp.ne.s32.totalorder %s113, %s115
      %p122 = scmp.eq.s32.totalorder %s21, 1
      %p123 = por %p121, %p122
      %p124 = scmp.ne.s32.totalorder %s115, %s116
      %p125 = scmp.eq.s32.totalorder %s21, 0
      %p126 = por %p124, %p125
      %p127 = scmp.ne.s32.totalorder %s115, %s116
      %p128 = scmp.eq.s32.totalorder %s22, 1
      %p129 = por %p127, %p128
      %p131 = scmp.ne.s32.totalorder %s116, %s130
      %p132 = scmp.eq.s32.totalorder %s22, 0
      %p133 = por %p131, %p132
      %s135 = sadd.s32 %s134, 1
      %p138 = scmp.eq.s32.totalorder %s16, 1
      %p139 = scmp.ne.s32.totalorder %s134, %s136
      %p140 = scmp.eq.s32.totalorder %s16, 0
      %p141 = por %p139, %p140
      %p142 = scmp.ne.s32.totalorder %s134, %s136
      %p143 = scmp.eq.s32.totalorder %s21, 1
      %p144 = por %p142, %p143
      %p145 = scmp.ne.s32.totalorder %s136, %s137
      %p146 = scmp.eq.s32.totalorder %s21, 0
      %p147 = por %p145, %p146
      %p148 = scmp.ne.s32.totalorder %s136, %s137
      %p149 = scmp.eq.s32.totalorder %s22, 1
      %p150 = por %p148, %p149
      %p152 = scmp.ne.s32.totalorder %s137, %s151
      %p153 = scmp.eq.s32.totalorder %s22, 0
      %p154 = por %p152, %p153
      %s156 = sadd.s32 %s155, 1
      %p159 = scmp.eq.s32.totalorder %s16, 1
      %p160 = scmp.ne.s32.totalorder %s155, %s157
      %p161 = scmp.eq.s32.totalorder %s16, 0
      %p162 = por %p160, %p161
      %p163 = scmp.ne.s32.totalorder %s155, %s157
      %p164 = scmp.eq.s32.totalorder %s21, 1
      %p165 = por %p163, %p164
      %p166 = scmp.ne.s32.totalorder %s157, %s158
      %p167 = scmp.eq.s32.totalorder %s21, 0
      %p168 = por %p166, %p167
      %p169 = scmp.ne.s32.totalorder %s157, %s158
      %p170 = scmp.eq.s32.totalorder %s22, 1
      %p171 = por %p169, %p170
      %p173 = scmp.ne.s32.totalorder %s158, %s172
      %p174 = scmp.eq.s32.totalorder %s22, 0
      %p175 = por %p173, %p174
      %s176 = ssub.s32 %s16, %s23
      %p177 = scmp.eq.s32.totalorder %s176, 0
      %s179 = sadd.s32 %s178, 1
      %s180 = scalar_select %p177, %s178, %s179
      %p183 = pneg %p177
      %p184 = scmp.eq.s32.totalorder %s16, 1
      %p185 = por %p183, %p184
      %p186 = scmp.ne.s32.totalorder %s178, %s181
      %p187 = scmp.eq.s32.totalorder %s16, 0
      %p188 = por %p186, %p187
      %p189 = scmp.ne.s32.totalorder %s178, %s181
      %p190 = scmp.eq.s32.totalorder %s21, 1
      %p191 = por %p189, %p190
      %p192 = scmp.ne.s32.totalorder %s181, %s182
      %p193 = scmp.eq.s32.totalorder %s21, 0
      %p194 = por %p192, %p193
      %p195 = scmp.ne.s32.totalorder %s181, %s182
      %p196 = scmp.eq.s32.totalorder %s22, 1
      %p197 = por %p195, %p196
      %p199 = scmp.ne.s32.totalorder %s182, %s198
      %p200 = scmp.eq.s32.totalorder %s22, 0
      %p201 = por %p199, %p200
      %p202 = scmp.le.s32.totalorder 1, %s16
      %p203 = scmp.lt.s32.totalorder %s16, 3
      %p204 = pnand %p202, %p203
      %p205 = pneg %p204
      // Predicated region
      $region9: #{timmnet_forward.1} parent=5 // pred_check
        _
      $region10: #{timmnet_forward.1} parent=5 // pred_check_branch
        %207 = sbr.rel (%p204) target = $region12
      $region11: #{timmnet_forward.1} parent=5 // pred_region
        %s208 = ssub.s32 %s16, 1
        // Predicated region
        $region13: #{timmnet_forward.1} parent=11 // pred_check
          %p209 = pneg %p63
        $region14: #{timmnet_forward.1} parent=11 // pred_check_branch
          %211 = sbr.rel (%p209) target = $region16
        $region15: #{timmnet_forward.1} parent=11 // pred_region
          _
        $region16: #{timmnet_forward.1} parent=11 // pred_fallthru
          _
        // Predicated region
        $region17: #{timmnet_forward.1} parent=11 // pred_check
          %p212 = pneg %p84
        $region18: #{timmnet_forward.1} parent=11 // pred_check_branch
          %214 = sbr.rel (%p212) target = $region20
        $region19: #{timmnet_forward.1} parent=11 // pred_region
          _
        $region20: #{timmnet_forward.1} parent=11 // pred_fallthru
          _
        // Predicated region
        $region21: #{timmnet_forward.1} parent=11 // pred_check
          %p215 = pneg %p105
        $region22: #{timmnet_forward.1} parent=11 // pred_check_branch
          %217 = sbr.rel (%p215) target = $region24
        $region23: #{timmnet_forward.1} parent=11 // pred_region
          _
        $region24: #{timmnet_forward.1} parent=11 // pred_fallthru
          _
        // Predicated region
        $region25: #{timmnet_forward.1} parent=11 // pred_check
          %p218 = pneg %p126
        $region26: #{timmnet_forward.1} parent=11 // pred_check_branch
          %220 = sbr.rel (%p218) target = $region28
        $region27: #{timmnet_forward.1} parent=11 // pred_region
          _
        $region28: #{timmnet_forward.1} parent=11 // pred_fallthru
          _
        // Predicated region
        $region29: #{timmnet_forward.1} parent=11 // pred_check
          %p221 = pneg %p147
        $region30: #{timmnet_forward.1} parent=11 // pred_check_branch
          %223 = sbr.rel (%p221) target = $region32
        $region31: #{timmnet_forward.1} parent=11 // pred_region
          _
        $region32: #{timmnet_forward.1} parent=11 // pred_fallthru
          _
        // Predicated region
        $region33: #{timmnet_forward.1} parent=11 // pred_check
          %p224 = pneg %p168
        $region34: #{timmnet_forward.1} parent=11 // pred_check_branch
          %226 = sbr.rel (%p224) target = $region36
        $region35: #{timmnet_forward.1} parent=11 // pred_region
          _
        $region36: #{timmnet_forward.1} parent=11 // pred_fallthru
          _
      $region12: #{timmnet_forward.1} parent=5 // pred_fallthru
        _
      %p227 = scmp.lt.s32.totalorder %s16, 2
      // Predicated region
      $region37: #{timmnet_forward.1} parent=5 // pred_check
        %p228 = pneg %p227
      $region38: #{timmnet_forward.1} parent=5 // pred_check_branch
        %230 = sbr.rel (%p228) target = $region40
      $region39: #{timmnet_forward.1} parent=5 // pred_region
        // Predicated region
        $region41: #{timmnet_forward.1} parent=39 // pred_check
          %p231 = pneg %p36
        $region42: #{timmnet_forward.1} parent=39 // pred_check_branch
          %233 = sbr.rel (%p231) target = $region44
        $region43: #{timmnet_forward.1} parent=39 // pred_region
          %p234 = scmp.lt.s32.totalorder %s16, 1
          %s235 = scalar_select %p234, %s16, 1
          %s236 = smul.addr %s235, 32
          %s237 = smul.addr %s236, 4
          %s238 = scalar_lea.vmem %s0, %s237
        $region44: #{timmnet_forward.1} parent=39 // pred_fallthru
          _
      $region40: #{timmnet_forward.1} parent=5 // pred_fallthru
        _
      %p239 = scmp.le.s32.totalorder 1, %s16
      %p240 = scmp.lt.s32.totalorder %s16, 3
      %p241 = pnand %p239, %p240
      %p242 = pneg %p241
      // Predicated region
      $region45: #{timmnet_forward.1} parent=5 // pred_check
        _
      $region46: #{timmnet_forward.1} parent=5 // pred_check_branch
        %244 = sbr.rel (%p241) target = $region48
      $region47: #{timmnet_forward.1} parent=5 // pred_region
        %s245 = ssub.s32 %s16, 1
        %p246 = scmp.lt.s32.totalorder %s21, 1
        %s247 = scalar_select %p246, %s21, 1
        %s248 = smul.addr %s247, 32
        %s249 = smul.addr %s248, 4
        %s250 = scalar_lea.vmem %s0, %s249
        %p251 = pneg %p42
        %p252 = pneg %p39
        %p253 = pneg %p63
        %p254 = pneg %p60
        %p255 = pneg %p84
        %p256 = pneg %p81
        %p257 = pneg %p105
        %p258 = pneg %p102
        %p259 = pneg %p126
        %p260 = pneg %p123
        %p261 = pneg %p147
        %p262 = pneg %p144
        %p263 = pneg %p168
        %p264 = pneg %p165
        %p265 = pneg %p194
        %p266 = pneg %p191
        %s267 = sand.u32 %s181, 1
        %s268 = scalar_lea.sflag [#allocation4], %s267
        %s269 = sand.u32 %s181, 1
        %s270 = scalar_lea.vmem [#allocation3], %s269
        %p271 = scmp.lt.s32.totalorder %s21, 1
        %s272 = scalar_select %p271, %s21, 1
        %s273 = smul.addr %s272, 32
        %s274 = smul.addr %s273, 4
        %s275 = scalar_lea.vmem %s0, %s274
        %v277 = vld [vmem:[%s275] sm:$0xf]
        %v278 = vld [vmem:[%s275 + $0x4] sm:$0xf]
        %v279 = vld [vmem:[%s275 + $0x8] sm:$0xf]
        %v280 = vld [vmem:[%s275 + $0xc] sm:$0xf]
        %v281 = vld [vmem:[%s275 + $0x10] sm:$0xf]
        %v282 = vld [vmem:[%s275 + $0x14] sm:$0xf]
        %v283 = vld [vmem:[%s275 + $0x18] sm:$0xf]
        %v284 = vld [vmem:[%s275 + $0x1c] sm:$0xf]
        %v285 = vld [vmem:[%s275 + $0x20] sm:$0xf]
        %v286 = vld [vmem:[%s275 + $0x24] sm:$0xf]
        %v287 = vld [vmem:[%s275 + $0x28] sm:$0xf]
        %v288 = vld [vmem:[%s275 + $0x2c] sm:$0xf]
        %v289 = vld [vmem:[%s275 + $0x30] sm:$0xf]
        %v290 = vld [vmem:[%s275 + $0x34] sm:$0xf]
        %v291 = vld [vmem:[%s275 + $0x38] sm:$0xf]
        %v292 = vld [vmem:[%s275 + $0x3c] sm:$0xf]
        %v293 = vld [vmem:[%s275 + $0x40] sm:$0xf]
        %v294 = vld [vmem:[%s275 + $0x44] sm:$0xf]
        %v295 = vld [vmem:[%s275 + $0x48] sm:$0xf]
        %v296 = vld [vmem:[%s275 + $0x4c] sm:$0xf]
        %v297 = vld [vmem:[%s275 + $0x50] sm:$0xf]
        %v298 = vld [vmem:[%s275 + $0x54] sm:$0xf]
        %v299 = vld [vmem:[%s275 + $0x58] sm:$0xf]
        %v300 = vld [vmem:[%s275 + $0x5c] sm:$0xf]
        %v301 = vld [vmem:[%s275 + $0x60] sm:$0xf]
        %v302 = vld [vmem:[%s275 + $0x64] sm:$0xf]
        %v303 = vld [vmem:[%s275 + $0x68] sm:$0xf]
        %v304 = vld [vmem:[%s275 + $0x6c] sm:$0xf]
        %v305 = vld [vmem:[%s275 + $0x70] sm:$0xf]
        %v306 = vld [vmem:[%s275 + $0x74] sm:$0xf]
        %v307 = vld [vmem:[%s275 + $0x78] sm:$0xf]
        %v308 = vld [vmem:[%s275 + $0x7c] sm:$0xf]
        %v309 = vld [vmem:[%s1] sm:$0xf]
        %v310 = vld [vmem:[%s1 + $0x4] sm:$0xf]
        %v311 = vld [vmem:[%s1 + $0x8] sm:$0xf]
        %v312 = vld [vmem:[%s1 + $0xc] sm:$0xf]
        %v313 = vld [vmem:[%s2] sm:$0x1]
        %v315 = vperm.slane %v313, 0
        %v349 = vunpack.c.l.b16 %v277
        %v350 = vunpack.c.l.b16 %v278
        %v351 = vunpack.c.l.b16 %v279
        %v352 = vunpack.c.l.b16 %v280
        %v353 = vunpack.c.l.b16 %v281
        %v354 = vunpack.c.l.b16 %v282
        %v355 = vunpack.c.l.b16 %v283
        %v356 = vunpack.c.l.b16 %v284
        %v357 = vunpack.c.l.b16 %v285
        %v358 = vunpack.c.l.b16 %v286
        %v359 = vunpack.c.l.b16 %v287
        %v360 = vunpack.c.l.b16 %v288
        %v361 = vunpack.c.l.b16 %v289
        %v362 = vunpack.c.l.b16 %v290
        %v363 = vunpack.c.l.b16 %v291
        %v364 = vunpack.c.l.b16 %v292
        %v365 = vunpack.c.l.b16 %v293
        %v366 = vunpack.c.l.b16 %v294
        %v367 = vunpack.c.l.b16 %v295
        %v368 = vunpack.c.l.b16 %v296
        %v369 = vunpack.c.l.b16 %v297
        %v370 = vunpack.c.l.b16 %v298
        %v371 = vunpack.c.l.b16 %v299
        %v372 = vunpack.c.l.b16 %v300
        %v373 = vunpack.c.l.b16 %v301
        %v374 = vunpack.c.l.b16 %v302
        %v375 = vunpack.c.l.b16 %v303
        %v376 = vunpack.c.l.b16 %v304
        %v377 = vunpack.c.l.b16 %v305
        %v378 = vunpack.c.l.b16 %v306
        %v379 = vunpack.c.l.b16 %v307
        %v380 = vunpack.c.l.b16 %v308
        %v381 = vpack.c.b16 %v350, %v349
        %v382 = vpack.c.b16 %v352, %v351
        %v383 = vpack.c.b16 %v354, %v353
        %v384 = vpack.c.b16 %v356, %v355
        %v385 = vpack.c.b16 %v358, %v357
        %v386 = vpack.c.b16 %v360, %v359
        %v387 = vpack.c.b16 %v362, %v361
        %v388 = vpack.c.b16 %v364, %v363
        %v389 = vpack.c.b16 %v366, %v365
        %v390 = vpack.c.b16 %v368, %v367
        %v391 = vpack.c.b16 %v370, %v369
        %v392 = vpack.c.b16 %v372, %v371
        %v393 = vpack.c.b16 %v374, %v373
        %v394 = vpack.c.b16 %v376, %v375
        %v395 = vpack.c.b16 %v378, %v377
        %v396 = vpack.c.b16 %v380, %v379
        %v401 = vunpack.c.l.b16 %v309
        %v402 = vunpack.c.l.b16 %v310
        %v403 = vunpack.c.l.b16 %v311
        %v404 = vunpack.c.l.b16 %v312
        %v405 = vpack.c.b16 %v402, %v401
        %v406 = vpack.c.b16 %v404, %v403
        %vm409 = vcmask 261120
        %v411 = vsel %vm409, %v381, 0
        %v414 = vsel %vm409, %v382, 0
        %v417 = vsel %vm409, %v383, 0
        %v420 = vsel %vm409, %v384, 0
        %v423 = vsel %vm409, %v385, 0
        %v426 = vsel %vm409, %v386, 0
        %v429 = vsel %vm409, %v387, 0
        %v432 = vsel %vm409, %v388, 0
        %v435 = vsel %vm409, %v389, 0
        %v438 = vsel %vm409, %v390, 0
        %v441 = vsel %vm409, %v391, 0
        %v444 = vsel %vm409, %v392, 0
        %v447 = vsel %vm409, %v393, 0
        %v450 = vsel %vm409, %v394, 0
        %v453 = vsel %vm409, %v395, 0
        %v456 = vsel %vm409, %v396, 0
        %458 = vmatpush.bf16.msra.mxu0 0
        %459 = vmatpush.bf16.msra.mxu0 0
        %460 = vmatpush.bf16.msra.mxu0 0
        %461 = vmatpush.bf16.msra.mxu0 0
        %462 = vmatpush.bf16.msra.mxu0 0
        %463 = vmatpush.bf16.msra.mxu0 0
        %464 = vmatpush.bf16.msra.mxu0 %v406
        %465 = vmatpush.bf16.msra.mxu0 %v405
        %466 = vmatmul.bf16.gmra.mxu0 %v411
        %v467 = vpop.f32.mrf.mxu0
        %v468 = vadd.f32 %v315, %v467
        %v469 = vpop.f32.mrf.mxu0
        %v470 = vadd.f32 %v315, %v469
        %471 = vmatmul.bf16.gmra.mxu0 %v414
        %v472 = vpop.f32.mrf.mxu0
        %v473 = vadd.f32 %v315, %v472
        %v474 = vpop.f32.mrf.mxu0
        %v475 = vadd.f32 %v315, %v474
        %476 = vmatmul.bf16.gmra.mxu0 %v417
        %v477 = vpop.f32.mrf.mxu0
        %v478 = vadd.f32 %v315, %v477
        %v479 = vpop.f32.mrf.mxu0
        %v480 = vadd.f32 %v315, %v479
        %481 = vmatmul.bf16.gmra.mxu0 %v420
        %v482 = vpop.f32.mrf.mxu0
        %v483 = vadd.f32 %v315, %v482
        %v484 = vpop.f32.mrf.mxu0
        %v485 = vadd.f32 %v315, %v484
        %486 = vmatmul.bf16.gmra.mxu0 %v423
        %v487 = vpop.f32.mrf.mxu0
        %v488 = vadd.f32 %v315, %v487
        %v489 = vpop.f32.mrf.mxu0
        %v490 = vadd.f32 %v315, %v489
        %491 = vmatmul.bf16.gmra.mxu0 %v426
        %v492 = vpop.f32.mrf.mxu0
        %v493 = vadd.f32 %v315, %v492
        %v494 = vpop.f32.mrf.mxu0
        %v495 = vadd.f32 %v315, %v494
        %496 = vmatmul.bf16.gmra.mxu0 %v429
        %v497 = vpop.f32.mrf.mxu0
        %v498 = vadd.f32 %v315, %v497
        %v499 = vpop.f32.mrf.mxu0
        %v500 = vadd.f32 %v315, %v499
        %501 = vmatmul.bf16.gmra.mxu0 %v432
        %v502 = vpop.f32.mrf.mxu0
        %v503 = vadd.f32 %v315, %v502
        %v504 = vpop.f32.mrf.mxu0
        %v505 = vadd.f32 %v315, %v504
        %506 = vmatmul.bf16.gmra.mxu0 %v435
        %v507 = vpop.f32.mrf.mxu0
        %v508 = vadd.f32 %v315, %v507
        %v509 = vpop.f32.mrf.mxu0
        %v510 = vadd.f32 %v315, %v509
        %511 = vmatmul.bf16.gmra.mxu0 %v438
        %v512 = vpop.f32.mrf.mxu0
        %v513 = vadd.f32 %v315, %v512
        %v514 = vpop.f32.mrf.mxu0
        %v515 = vadd.f32 %v315, %v514
        %516 = vmatmul.bf16.gmra.mxu0 %v441
        %v517 = vpop.f32.mrf.mxu0
        %v518 = vadd.f32 %v315, %v517
        %v519 = vpop.f32.mrf.mxu0
        %v520 = vadd.f32 %v315, %v519
        %521 = vmatmul.bf16.gmra.mxu0 %v444
        %v522 = vpop.f32.mrf.mxu0
        %v523 = vadd.f32 %v315, %v522
        %v524 = vpop.f32.mrf.mxu0
        %v525 = vadd.f32 %v315, %v524
        %526 = vmatmul.bf16.gmra.mxu0 %v447
        %v527 = vpop.f32.mrf.mxu0
        %v528 = vadd.f32 %v315, %v527
        %v529 = vpop.f32.mrf.mxu0
        %v530 = vadd.f32 %v315, %v529
        %531 = vmatmul.bf16.gmra.mxu0 %v450
        %v532 = vpop.f32.mrf.mxu0
        %v533 = vadd.f32 %v315, %v532
        %v534 = vpop.f32.mrf.mxu0
        %v535 = vadd.f32 %v315, %v534
        %536 = vmatmul.bf16.gmra.mxu0 %v453
        %v537 = vpop.f32.mrf.mxu0
        %v538 = vadd.f32 %v315, %v537
        %v539 = vpop.f32.mrf.mxu0
        %v540 = vadd.f32 %v315, %v539
        %541 = vmatmul.bf16.gmra.mxu0 %v456
        %v542 = vpop.f32.mrf.mxu0
        %v543 = vadd.f32 %v315, %v542
        %v544 = vpop.f32.mrf.mxu0
        %v545 = vadd.f32 %v315, %v544
        %546 = vdwg.mxu0
        %v547 = vmax.f32 %v468, 0.0
        %v548 = vmax.f32 %v470, 0.0
        %v549 = vmax.f32 %v473, 0.0
        %v550 = vmax.f32 %v475, 0.0
        %v551 = vmax.f32 %v478, 0.0
        %v552 = vmax.f32 %v480, 0.0
        %v553 = vmax.f32 %v483, 0.0
        %v554 = vmax.f32 %v485, 0.0
        %v555 = vmax.f32 %v488, 0.0
        %v556 = vmax.f32 %v490, 0.0
        %v557 = vmax.f32 %v493, 0.0
        %v558 = vmax.f32 %v495, 0.0
        %v559 = vmax.f32 %v498, 0.0
        %v560 = vmax.f32 %v500, 0.0
        %v561 = vmax.f32 %v503, 0.0
        %v562 = vmax.f32 %v505, 0.0
        %v563 = vmax.f32 %v508, 0.0
        %v564 = vmax.f32 %v510, 0.0
        %v565 = vmax.f32 %v513, 0.0
        %v566 = vmax.f32 %v515, 0.0
        %v567 = vmax.f32 %v518, 0.0
        %v568 = vmax.f32 %v520, 0.0
        %v569 = vmax.f32 %v523, 0.0
        %v570 = vmax.f32 %v525, 0.0
        %v571 = vmax.f32 %v528, 0.0
        %v572 = vmax.f32 %v530, 0.0
        %v573 = vmax.f32 %v533, 0.0
        %v574 = vmax.f32 %v535, 0.0
        %v575 = vmax.f32 %v538, 0.0
        %v576 = vmax.f32 %v540, 0.0
        %v577 = vmax.f32 %v543, 0.0
        %v578 = vmax.f32 %v545, 0.0
        %v579 = vpack.c.bf16 %v547, %v547
        %v580 = vpack.c.bf16 %v548, %v548
        %v581 = vpack.c.bf16 %v549, %v549
        %v582 = vpack.c.bf16 %v550, %v550
        %v583 = vpack.c.bf16 %v551, %v551
        %v584 = vpack.c.bf16 %v552, %v552
        %v585 = vpack.c.bf16 %v553, %v553
        %v586 = vpack.c.bf16 %v554, %v554
        %v587 = vpack.c.bf16 %v555, %v555
        %v588 = vpack.c.bf16 %v556, %v556
        %v589 = vpack.c.bf16 %v557, %v557
        %v590 = vpack.c.bf16 %v558, %v558
        %v591 = vpack.c.bf16 %v559, %v559
        %v592 = vpack.c.bf16 %v560, %v560
        %v593 = vpack.c.bf16 %v561, %v561
        %v594 = vpack.c.bf16 %v562, %v562
        %v595 = vpack.c.bf16 %v563, %v563
        %v596 = vpack.c.bf16 %v564, %v564
        %v597 = vpack.c.bf16 %v565, %v565
        %v598 = vpack.c.bf16 %v566, %v566
        %v599 = vpack.c.bf16 %v567, %v567
        %v600 = vpack.c.bf16 %v568, %v568
        %v601 = vpack.c.bf16 %v569, %v569
        %v602 = vpack.c.bf16 %v570, %v570
        %v603 = vpack.c.bf16 %v571, %v571
        %v604 = vpack.c.bf16 %v572, %v572
        %v605 = vpack.c.bf16 %v573, %v573
        %v606 = vpack.c.bf16 %v574, %v574
        %v607 = vpack.c.bf16 %v575, %v575
        %v608 = vpack.c.bf16 %v576, %v576
        %v609 = vpack.c.bf16 %v577, %v577
        %v610 = vpack.c.bf16 %v578, %v578
        %vm611 = vcmask 257024
        %612 = vst.msk [vmem:[#allocation2] sm:$0xf] %vm611, 0
        %613 = vst.msk [vmem:[#allocation2 + $0x4] sm:$0xf] %vm611, 0
        %614 = vst.msk [vmem:[#allocation2 + $0x8] sm:$0xf] %vm611, 0
        %615 = vst.msk [vmem:[#allocation2 + $0xc] sm:$0xf] %vm611, 0
        %616 = vst.msk [vmem:[#allocation2 + $0x10] sm:$0xf] %vm611, 0
        %617 = vst.msk [vmem:[#allocation2 + $0x14] sm:$0xf] %vm611, 0
        %618 = vst.msk [vmem:[#allocation2 + $0x18] sm:$0xf] %vm611, 0
        %619 = vst.msk [vmem:[#allocation2 + $0x1c] sm:$0xf] %vm611, 0
        %620 = vst.msk [vmem:[#allocation2 + $0x20] sm:$0xf] %vm611, 0
        %621 = vst.msk [vmem:[#allocation2 + $0x24] sm:$0xf] %vm611, 0
        %622 = vst.msk [vmem:[#allocation2 + $0x28] sm:$0xf] %vm611, 0
        %623 = vst.msk [vmem:[#allocation2 + $0x2c] sm:$0xf] %vm611, 0
        %624 = vst.msk [vmem:[#allocation2 + $0x30] sm:$0xf] %vm611, 0
        %625 = vst.msk [vmem:[#allocation2 + $0x34] sm:$0xf] %vm611, 0
        %626 = vst.msk [vmem:[#allocation2 + $0x38] sm:$0xf] %vm611, 0
        %627 = vst.msk [vmem:[#allocation2 + $0x3c] sm:$0xf] %vm611, 0
        %628 = vst.msk [vmem:[#allocation2 + $0x40] sm:$0xf] %vm611, 0
        %629 = vst.msk [vmem:[#allocation2 + $0x44] sm:$0xf] %vm611, 0
        %630 = vst.msk [vmem:[#allocation2 + $0x48] sm:$0xf] %vm611, 0
        %631 = vst.msk [vmem:[#allocation2 + $0x4c] sm:$0xf] %vm611, 0
        %632 = vst.msk [vmem:[#allocation2 + $0x50] sm:$0xf] %vm611, 0
        %633 = vst.msk [vmem:[#allocation2 + $0x54] sm:$0xf] %vm611, 0
        %634 = vst.msk [vmem:[#allocation2 + $0x58] sm:$0xf] %vm611, 0
        %635 = vst.msk [vmem:[#allocation2 + $0x5c] sm:$0xf] %vm611, 0
        %636 = vst.msk [vmem:[#allocation2 + $0x60] sm:$0xf] %vm611, 0
        %637 = vst.msk [vmem:[#allocation2 + $0x64] sm:$0xf] %vm611, 0
        %638 = vst.msk [vmem:[#allocation2 + $0x68] sm:$0xf] %vm611, 0
        %639 = vst.msk [vmem:[#allocation2 + $0x6c] sm:$0xf] %vm611, 0
        %640 = vst.msk [vmem:[#allocation2 + $0x70] sm:$0xf] %vm611, 0
        %641 = vst.msk [vmem:[#allocation2 + $0x74] sm:$0xf] %vm611, 0
        %642 = vst.msk [vmem:[#allocation2 + $0x78] sm:$0xf] %vm611, 0
        %643 = vst.msk [vmem:[#allocation2 + $0x7c] sm:$0xf] %vm611, 0
        %644 = vst.msk [vmem:[#allocation2 + $0x80] sm:$0xf] %vm611, 0
        %645 = vst.msk [vmem:[#allocation2 + $0x84] sm:$0xf] %vm611, 0
        %646 = vst.msk [vmem:[#allocation2 + $0x88] sm:$0xf] %vm611, 0
        %647 = vst.msk [vmem:[#allocation2 + $0x8c] sm:$0xf] %vm611, 0
        %648 = vst.msk [vmem:[#allocation2 + $0x90] sm:$0xf] %vm611, 0
        %649 = vst.msk [vmem:[#allocation2 + $0x94] sm:$0xf] %vm611, 0
        %650 = vst.msk [vmem:[#allocation2 + $0x98] sm:$0xf] %vm611, 0
        %651 = vst.msk [vmem:[#allocation2 + $0x9c] sm:$0xf] %vm611, 0
        %652 = vst.msk [vmem:[#allocation2 + $0xa0] sm:$0xf] %vm611, 0
        %653 = vst.msk [vmem:[#allocation2 + $0xa4] sm:$0xf] %vm611, 0
        %654 = vst.msk [vmem:[#allocation2 + $0xa8] sm:$0xf] %vm611, 0
        %655 = vst.msk [vmem:[#allocation2 + $0xac] sm:$0xf] %vm611, 0
        %656 = vst.msk [vmem:[#allocation2 + $0xb0] sm:$0xf] %vm611, 0
        %657 = vst.msk [vmem:[#allocation2 + $0xb4] sm:$0xf] %vm611, 0
        %658 = vst.msk [vmem:[#allocation2 + $0xb8] sm:$0xf] %vm611, 0
        %659 = vst.msk [vmem:[#allocation2 + $0xbc] sm:$0xf] %vm611, 0
        %660 = vst.msk [vmem:[#allocation2 + $0xc0] sm:$0xf] %vm611, 0
        %661 = vst.msk [vmem:[#allocation2 + $0xc4] sm:$0xf] %vm611, 0
        %662 = vst.msk [vmem:[#allocation2 + $0xc8] sm:$0xf] %vm611, 0
        %663 = vst.msk [vmem:[#allocation2 + $0xcc] sm:$0xf] %vm611, 0
        %664 = vst.msk [vmem:[#allocation2 + $0xd0] sm:$0xf] %vm611, 0
        %665 = vst.msk [vmem:[#allocation2 + $0xd4] sm:$0xf] %vm611, 0
        %666 = vst.msk [vmem:[#allocation2 + $0xd8] sm:$0xf] %vm611, 0
        %667 = vst.msk [vmem:[#allocation2 + $0xdc] sm:$0xf] %vm611, 0
        %668 = vst.msk [vmem:[#allocation2 + $0xe0] sm:$0xf] %vm611, 0
        %669 = vst.msk [vmem:[#allocation2 + $0xe4] sm:$0xf] %vm611, 0
        %670 = vst.msk [vmem:[#allocation2 + $0xe8] sm:$0xf] %vm611, 0
        %671 = vst.msk [vmem:[#allocation2 + $0xec] sm:$0xf] %vm611, 0
        %672 = vst.msk [vmem:[#allocation2 + $0xf0] sm:$0xf] %vm611, 0
        %673 = vst.msk [vmem:[#allocation2 + $0xf4] sm:$0xf] %vm611, 0
        %674 = vst.msk [vmem:[#allocation2 + $0xf8] sm:$0xf] %vm611, 0
        %675 = vst.msk [vmem:[#allocation2 + $0xfc] sm:$0xf] %vm611, 0
        %676 = vst.msk [vmem:[#allocation2 + $0x100] sm:$0xf] %vm611, 0
        %677 = vst.msk [vmem:[#allocation2 + $0x104] sm:$0xf] %vm611, 0
        %678 = vst.msk [vmem:[#allocation2 + $0x108] sm:$0xf] %vm611, 0
        %679 = vst.msk [vmem:[#allocation2 + $0x10c] sm:$0xf] %vm611, 0
        %680 = vst.msk [vmem:[#allocation2 + $0x110] sm:$0xf] %vm611, 0
        %681 = vst.msk [vmem:[#allocation2 + $0x114] sm:$0xf] %vm611, 0
        %682 = vst.msk [vmem:[#allocation2 + $0x118] sm:$0xf] %vm611, 0
        %683 = vst.msk [vmem:[#allocation2 + $0x11c] sm:$0xf] %vm611, 0
        %s684 = scalar_lea.vmem [#allocation2], 8
        %685 = vst.msk [vmem:[%s684 + $0x4] sm:$0xf] %vm611, %v579
        %686 = vst.msk [vmem:[%s684 + $0xc] sm:$0xf] %vm611, %v580
        %687 = vst.msk [vmem:[%s684 + $0x14] sm:$0xf] %vm611, %v581
        %688 = vst.msk [vmem:[%s684 + $0x1c] sm:$0xf] %vm611, %v582
        %689 = vst.msk [vmem:[%s684 + $0x24] sm:$0xf] %vm611, %v583
        %690 = vst.msk [vmem:[%s684 + $0x2c] sm:$0xf] %vm611, %v584
        %691 = vst.msk [vmem:[%s684 + $0x34] sm:$0xf] %vm611, %v585
        %692 = vst.msk [vmem:[%s684 + $0x3c] sm:$0xf] %vm611, %v586
        %s693 = scalar_lea.vmem [#allocation2], 80
        %694 = vst.msk [vmem:[%s693] sm:$0xf] %vm611, %v587
        %695 = vst.msk [vmem:[%s693 + $0x8] sm:$0xf] %vm611, %v588
        %696 = vst.msk [vmem:[%s693 + $0x10] sm:$0xf] %vm611, %v589
        %697 = vst.msk [vmem:[%s693 + $0x18] sm:$0xf] %vm611, %v590
        %698 = vst.msk [vmem:[%s693 + $0x20] sm:$0xf] %vm611, %v591
        %699 = vst.msk [vmem:[%s693 + $0x28] sm:$0xf] %vm611, %v592
        %700 = vst.msk [vmem:[%s693 + $0x30] sm:$0xf] %vm611, %v593
        %701 = vst.msk [vmem:[%s693 + $0x38] sm:$0xf] %vm611, %v594
        %s702 = scalar_lea.vmem [#allocation2], 144
        %703 = vst.msk [vmem:[%s702 + $0x4] sm:$0xf] %vm611, %v595
        %704 = vst.msk [vmem:[%s702 + $0xc] sm:$0xf] %vm611, %v596
        %705 = vst.msk [vmem:[%s702 + $0x14] sm:$0xf] %vm611, %v597
        %706 = vst.msk [vmem:[%s702 + $0x1c] sm:$0xf] %vm611, %v598
        %707 = vst.msk [vmem:[%s702 + $0x24] sm:$0xf] %vm611, %v599
        %708 = vst.msk [vmem:[%s702 + $0x2c] sm:$0xf] %vm611, %v600
        %709 = vst.msk [vmem:[%s702 + $0x34] sm:$0xf] %vm611, %v601
        %710 = vst.msk [vmem:[%s702 + $0x3c] sm:$0xf] %vm611, %v602
        %s711 = scalar_lea.vmem [#allocation2], 216
        %712 = vst.msk [vmem:[%s711] sm:$0xf] %vm611, %v603
        %713 = vst.msk [vmem:[%s711 + $0x8] sm:$0xf] %vm611, %v604
        %714 = vst.msk [vmem:[%s711 + $0x10] sm:$0xf] %vm611, %v605
        %715 = vst.msk [vmem:[%s711 + $0x18] sm:$0xf] %vm611, %v606
        %716 = vst.msk [vmem:[%s711 + $0x20] sm:$0xf] %vm611, %v607
        %717 = vst.msk [vmem:[%s711 + $0x28] sm:$0xf] %vm611, %v608
        %718 = vst.msk [vmem:[%s711 + $0x30] sm:$0xf] %vm611, %v609
        %719 = vst.msk [vmem:[%s711 + $0x38] sm:$0xf] %vm611, %v610
        %v720 = vld [vmem:[#allocation2] sm:$0x8]
        %v721 = vld [vmem:[#allocation2 + $0x4] sm:$0xf]
        %v722 = vld [vmem:[#allocation2 + $0x8] sm:$0x8]
        %v723 = vld [vmem:[#allocation2 + $0xc] sm:$0xf]
        %v724 = vld [vmem:[#allocation2 + $0x10] sm:$0x8]
        %v725 = vld [vmem:[#allocation2 + $0x14] sm:$0xf]
        %v726 = vld [vmem:[#allocation2 + $0x18] sm:$0x8]
        %v727 = vld [vmem:[#allocation2 + $0x1c] sm:$0xf]
        %v728 = vld [vmem:[#allocation2 + $0x20] sm:$0x8]
        %v729 = vld [vmem:[#allocation2 + $0x24] sm:$0xf]
        %v730 = vld [vmem:[#allocation2 + $0x28] sm:$0x8]
        %v731 = vld [vmem:[#allocation2 + $0x2c] sm:$0xf]
        %v732 = vld [vmem:[#allocation2 + $0x30] sm:$0x8]
        %v733 = vld [vmem:[#allocation2 + $0x34] sm:$0xf]
        %v734 = vld [vmem:[#allocation2 + $0x38] sm:$0x8]
        %v735 = vld [vmem:[#allocation2 + $0x3c] sm:$0xf]
        %vm736 = vsmask.f32 256
        %vm737 = vsmask.f32 4368
        %vm738 = vmor %vm736, %vm737
        %v740 = vshrl.u32 %v720, 16
        %v742 = vrot.slane %v740, 7
        %v743 = vrot.slane %v742, 4
        %v745 = vshrl.u32 %v721, 16
        %v747 = vrot.slane %v745, 7
        %v748 = vshll.u32 %v721, 16
        %v750 = vor.u32 %v747, %v748
        %v751 = vsel %vm738, %v743, %v750
        %v753 = vshrl.u32 %v722, 16
        %v755 = vrot.slane %v753, 7
        %v756 = vrot.slane %v755, 4
        %v758 = vshrl.u32 %v723, 16
        %v760 = vrot.slane %v758, 7
        %v761 = vshll.u32 %v723, 16
        %v763 = vor.u32 %v760, %v761
        %v764 = vsel %vm738, %v756, %v763
        %v766 = vshrl.u32 %v724, 16
        %v768 = vrot.slane %v766, 7
        %v769 = vrot.slane %v768, 4
        %v771 = vshrl.u32 %v725, 16
        %v773 = vrot.slane %v771, 7
        %v774 = vshll.u32 %v725, 16
        %v776 = vor.u32 %v773, %v774
        %v777 = vsel %vm738, %v769, %v776
        %v779 = vshrl.u32 %v726, 16
        %v781 = vrot.slane %v779, 7
        %v782 = vrot.slane %v781, 4
        %v784 = vshrl.u32 %v727, 16
        %v786 = vrot.slane %v784, 7
        %v787 = vshll.u32 %v727, 16
        %v789 = vor.u32 %v786, %v787
        %v790 = vsel %vm738, %v782, %v789
        %v792 = vshrl.u32 %v728, 16
        %v794 = vrot.slane %v792, 7
        %v795 = vrot.slane %v794, 4
        %v797 = vshrl.u32 %v729, 16
        %v799 = vrot.slane %v797, 7
        %v800 = vshll.u32 %v729, 16
        %v802 = vor.u32 %v799, %v800
        %v803 = vsel %vm738, %v795, %v802
        %v805 = vshrl.u32 %v730, 16
        %v807 = vrot.slane %v805, 7
        %v808 = vrot.slane %v807, 4
        %v810 = vshrl.u32 %v731, 16
        %v812 = vrot.slane %v810, 7
        %v813 = vshll.u32 %v731, 16
        %v815 = vor.u32 %v812, %v813
        %v816 = vsel %vm738, %v808, %v815
        %v818 = vshrl.u32 %v732, 16
        %v820 = vrot.slane %v818, 7
        %v821 = vrot.slane %v820, 4
        %v823 = vshrl.u32 %v733, 16
        %v825 = vrot.slane %v823, 7
        %v826 = vshll.u32 %v733, 16
        %v828 = vor.u32 %v825, %v826
        %v829 = vsel %vm738, %v821, %v828
        %v831 = vshrl.u32 %v734, 16
        %v833 = vrot.slane %v831, 7
        %v834 = vrot.slane %v833, 4
        %v836 = vshrl.u32 %v735, 16
        %v838 = vrot.slane %v836, 7
        %v839 = vshll.u32 %v735, 16
        %v841 = vor.u32 %v838, %v839
        %v842 = vsel %vm738, %v834, %v841
        %s843 = scalar_lea.vmem [#allocation2], 72
        %v844 = vld [vmem:[%s843] sm:$0xf]
        %v845 = vld [vmem:[%s843 + $0x8] sm:$0xf]
        %v846 = vld [vmem:[%s843 + $0x10] sm:$0xf]
        %v847 = vld [vmem:[%s843 + $0x18] sm:$0xf]
        %v848 = vld [vmem:[%s843 + $0x20] sm:$0xf]
        %v849 = vld [vmem:[%s843 + $0x28] sm:$0xf]
        %v850 = vld [vmem:[%s843 + $0x30] sm:$0xf]
        %v851 = vld [vmem:[%s843 + $0x38] sm:$0xf]
        %v852 = vld [vmem:[%s702] sm:$0x8]
        %v853 = vld [vmem:[%s702 + $0x4] sm:$0xf]
        %v854 = vld [vmem:[%s702 + $0x8] sm:$0x8]
        %v855 = vld [vmem:[%s702 + $0xc] sm:$0xf]
        %v856 = vld [vmem:[%s702 + $0x10] sm:$0x8]
        %v857 = vld [vmem:[%s702 + $0x14] sm:$0xf]
        %v858 = vld [vmem:[%s702 + $0x18] sm:$0x8]
        %v859 = vld [vmem:[%s702 + $0x1c] sm:$0xf]
        %v860 = vld [vmem:[%s702 + $0x20] sm:$0x8]
        %v861 = vld [vmem:[%s702 + $0x24] sm:$0xf]
        %v862 = vld [vmem:[%s702 + $0x28] sm:$0x8]
        %v863 = vld [vmem:[%s702 + $0x2c] sm:$0xf]
        %v864 = vld [vmem:[%s702 + $0x30] sm:$0x8]
        %v865 = vld [vmem:[%s702 + $0x34] sm:$0xf]
        %v866 = vld [vmem:[%s702 + $0x38] sm:$0x8]
        %v867 = vld [vmem:[%s702 + $0x3c] sm:$0xf]
        %v869 = vshrl.u32 %v852, 16
        %v871 = vrot.slane %v869, 7
        %v872 = vrot.slane %v871, 4
        %v874 = vshrl.u32 %v853, 16
        %v876 = vrot.slane %v874, 7
        %v877 = vshll.u32 %v853, 16
        %v879 = vor.u32 %v876, %v877
        %v880 = vsel %vm738, %v872, %v879
        %v882 = vshrl.u32 %v854, 16
        %v884 = vrot.slane %v882, 7
        %v885 = vrot.slane %v884, 4
        %v887 = vshrl.u32 %v855, 16
        %v889 = vrot.slane %v887, 7
        %v890 = vshll.u32 %v855, 16
        %v892 = vor.u32 %v889, %v890
        %v893 = vsel %vm738, %v885, %v892
        %v895 = vshrl.u32 %v856, 16
        %v897 = vrot.slane %v895, 7
        %v898 = vrot.slane %v897, 4
        %v900 = vshrl.u32 %v857, 16
        %v902 = vrot.slane %v900, 7
        %v903 = vshll.u32 %v857, 16
        %v905 = vor.u32 %v902, %v903
        %v906 = vsel %vm738, %v898, %v905
        %v908 = vshrl.u32 %v858, 16
        %v910 = vrot.slane %v908, 7
        %v911 = vrot.slane %v910, 4
        %v913 = vshrl.u32 %v859, 16
        %v915 = vrot.slane %v913, 7
        %v916 = vshll.u32 %v859, 16
        %v918 = vor.u32 %v915, %v916
        %v919 = vsel %vm738, %v911, %v918
        %v921 = vshrl.u32 %v860, 16
        %v923 = vrot.slane %v921, 7
        %v924 = vrot.slane %v923, 4
        %v926 = vshrl.u32 %v861, 16
        %v928 = vrot.slane %v926, 7
        %v929 = vshll.u32 %v861, 16
        %v931 = vor.u32 %v928, %v929
        %v932 = vsel %vm738, %v924, %v931
        %v934 = vshrl.u32 %v862, 16
        %v936 = vrot.slane %v934, 7
        %v937 = vrot.slane %v936, 4
        %v939 = vshrl.u32 %v863, 16
        %v941 = vrot.slane %v939, 7
        %v942 = vshll.u32 %v863, 16
        %v944 = vor.u32 %v941, %v942
        %v945 = vsel %vm738, %v937, %v944
        %v947 = vshrl.u32 %v864, 16
        %v949 = vrot.slane %v947, 7
        %v950 = vrot.slane %v949, 4
        %v952 = vshrl.u32 %v865, 16
        %v954 = vrot.slane %v952, 7
        %v955 = vshll.u32 %v865, 16
        %v957 = vor.u32 %v954, %v955
        %v958 = vsel %vm738, %v950, %v957
        %v960 = vshrl.u32 %v866, 16
        %v962 = vrot.slane %v960, 7
        %v963 = vrot.slane %v962, 4
        %v965 = vshrl.u32 %v867, 16
        %v967 = vrot.slane %v965, 7
        %v968 = vshll.u32 %v867, 16
        %v970 = vor.u32 %v967, %v968
        %v971 = vsel %vm738, %v963, %v970
        %v972 = vld [vmem:[%s711] sm:$0xf]
        %v973 = vld [vmem:[%s711 + $0x8] sm:$0xf]
        %v974 = vld [vmem:[%s711 + $0x10] sm:$0xf]
        %v975 = vld [vmem:[%s711 + $0x18] sm:$0xf]
        %v976 = vld [vmem:[%s711 + $0x20] sm:$0xf]
        %v977 = vld [vmem:[%s711 + $0x28] sm:$0xf]
        %v978 = vld [vmem:[%s711 + $0x30] sm:$0xf]
        %v979 = vld [vmem:[%s711 + $0x38] sm:$0xf]
        %v980 = vld [vmem:[%s684] sm:$0x8]
        %v981 = vld [vmem:[%s684 + $0x4] sm:$0xf]
        %v982 = vld [vmem:[%s684 + $0x8] sm:$0x8]
        %v983 = vld [vmem:[%s684 + $0xc] sm:$0xf]
        %v984 = vld [vmem:[%s684 + $0x10] sm:$0x8]
        %v985 = vld [vmem:[%s684 + $0x14] sm:$0xf]
        %v986 = vld [vmem:[%s684 + $0x18] sm:$0x8]
        %v987 = vld [vmem:[%s684 + $0x1c] sm:$0xf]
        %v988 = vld [vmem:[%s684 + $0x20] sm:$0x8]
        %v989 = vld [vmem:[%s684 + $0x24] sm:$0xf]
        %v990 = vld [vmem:[%s684 + $0x28] sm:$0x8]
        %v991 = vld [vmem:[%s684 + $0x2c] sm:$0xf]
        %v992 = vld [vmem:[%s684 + $0x30] sm:$0x8]
        %v993 = vld [vmem:[%s684 + $0x34] sm:$0xf]
        %v994 = vld [vmem:[%s684 + $0x38] sm:$0x8]
        %v995 = vld [vmem:[%s684 + $0x3c] sm:$0xf]
        %v997 = vshrl.u32 %v980, 16
        %v999 = vrot.slane %v997, 7
        %v1000 = vrot.slane %v999, 4
        %v1002 = vshrl.u32 %v981, 16
        %v1004 = vrot.slane %v1002, 7
        %v1005 = vshll.u32 %v981, 16
        %v1007 = vor.u32 %v1004, %v1005
        %v1008 = vsel %vm738, %v1000, %v1007
        %v1010 = vshrl.u32 %v982, 16
        %v1012 = vrot.slane %v1010, 7
        %v1013 = vrot.slane %v1012, 4
        %v1015 = vshrl.u32 %v983, 16
        %v1017 = vrot.slane %v1015, 7
        %v1018 = vshll.u32 %v983, 16
        %v1020 = vor.u32 %v1017, %v1018
        %v1021 = vsel %vm738, %v1013, %v1020
        %v1023 = vshrl.u32 %v984, 16
        %v1025 = vrot.slane %v1023, 7
        %v1026 = vrot.slane %v1025, 4
        %v1028 = vshrl.u32 %v985, 16
        %v1030 = vrot.slane %v1028, 7
        %v1031 = vshll.u32 %v985, 16
        %v1033 = vor.u32 %v1030, %v1031
        %v1034 = vsel %vm738, %v1026, %v1033
        %v1036 = vshrl.u32 %v986, 16
        %v1038 = vrot.slane %v1036, 7
        %v1039 = vrot.slane %v1038, 4
        %v1041 = vshrl.u32 %v987, 16
        %v1043 = vrot.slane %v1041, 7
        %v1044 = vshll.u32 %v987, 16
        %v1046 = vor.u32 %v1043, %v1044
        %v1047 = vsel %vm738, %v1039, %v1046
        %v1049 = vshrl.u32 %v988, 16
        %v1051 = vrot.slane %v1049, 7
        %v1052 = vrot.slane %v1051, 4
        %v1054 = vshrl.u32 %v989, 16
        %v1056 = vrot.slane %v1054, 7
        %v1057 = vshll.u32 %v989, 16
        %v1059 = vor.u32 %v1056, %v1057
        %v1060 = vsel %vm738, %v1052, %v1059
        %v1062 = vshrl.u32 %v990, 16
        %v1064 = vrot.slane %v1062, 7
        %v1065 = vrot.slane %v1064, 4
        %v1067 = vshrl.u32 %v991, 16
        %v1069 = vrot.slane %v1067, 7
        %v1070 = vshll.u32 %v991, 16
        %v1072 = vor.u32 %v1069, %v1070
        %v1073 = vsel %vm738, %v1065, %v1072
        %v1075 = vshrl.u32 %v992, 16
        %v1077 = vrot.slane %v1075, 7
        %v1078 = vrot.slane %v1077, 4
        %v1080 = vshrl.u32 %v993, 16
        %v1082 = vrot.slane %v1080, 7
        %v1083 = vshll.u32 %v993, 16
        %v1085 = vor.u32 %v1082, %v1083
        %v1086 = vsel %vm738, %v1078, %v1085
        %v1088 = vshrl.u32 %v994, 16
        %v1090 = vrot.slane %v1088, 7
        %v1091 = vrot.slane %v1090, 4
        %v1093 = vshrl.u32 %v995, 16
        %v1095 = vrot.slane %v1093, 7
        %v1096 = vshll.u32 %v995, 16
        %v1098 = vor.u32 %v1095, %v1096
        %v1099 = vsel %vm738, %v1091, %v1098
        %v1100 = vld [vmem:[%s693] sm:$0xf]
        %v1101 = vld [vmem:[%s693 + $0x8] sm:$0xf]
        %v1102 = vld [vmem:[%s693 + $0x10] sm:$0xf]
        %v1103 = vld [vmem:[%s693 + $0x18] sm:$0xf]
        %v1104 = vld [vmem:[%s693 + $0x20] sm:$0xf]
        %v1105 = vld [vmem:[%s693 + $0x28] sm:$0xf]
        %v1106 = vld [vmem:[%s693 + $0x30] sm:$0xf]
        %v1107 = vld [vmem:[%s693 + $0x38] sm:$0xf]
        %v1108 = vunpack.c.l.b16 %v751
        %v1109 = vunpack.c.l.b16 %v764
        %v1110 = vunpack.c.l.b16 %v777
        %v1111 = vunpack.c.l.b16 %v790
        %v1112 = vunpack.c.l.b16 %v803
        %v1113 = vunpack.c.l.b16 %v816
        %v1114 = vunpack.c.l.b16 %v829
        %v1115 = vunpack.c.l.b16 %v842
        %v1116 = vpack.c.b16 %v1109, %v1108
        %v1117 = vpack.c.b16 %v1111, %v1110
        %v1118 = vpack.c.b16 %v1113, %v1112
        %v1119 = vpack.c.b16 %v1115, %v1114
        %v1128 = vunpack.c.l.b16 %v844
        %v1129 = vunpack.c.l.b16 %v845
        %v1130 = vunpack.c.l.b16 %v846
        %v1131 = vunpack.c.l.b16 %v847
        %v1132 = vunpack.c.l.b16 %v848
        %v1133 = vunpack.c.l.b16 %v849
        %v1134 = vunpack.c.l.b16 %v850
        %v1135 = vunpack.c.l.b16 %v851
        %v1136 = vpack.c.b16 %v1129, %v1128
        %v1137 = vpack.c.b16 %v1131, %v1130
        %v1138 = vpack.c.b16 %v1133, %v1132
        %v1139 = vpack.c.b16 %v1135, %v1134
        %1140 = vrot.lane.b32.xlu0 %v1136, 32
        %v1141 = vpop.permute.xlu0 %1140
        %1142 = vrot.lane.b32.xlu0 %v1137, 32
        %v1143 = vpop.permute.xlu0 %1142
        %1144 = vrot.lane.b32.xlu0 %v1138, 32
        %v1145 = vpop.permute.xlu0 %1144
        %1146 = vrot.lane.b32.xlu0 %v1139, 32
        %v1147 = vpop.permute.xlu0 %1146
        %v1156 = vunpack.c.l.b16 %v721
        %v1157 = vunpack.c.l.b16 %v723
        %v1158 = vunpack.c.l.b16 %v725
        %v1159 = vunpack.c.l.b16 %v727
        %v1160 = vunpack.c.l.b16 %v729
        %v1161 = vunpack.c.l.b16 %v731
        %v1162 = vunpack.c.l.b16 %v733
        %v1163 = vunpack.c.l.b16 %v735
        %v1164 = vpack.c.b16 %v1157, %v1156
        %v1165 = vpack.c.b16 %v1159, %v1158
        %v1166 = vpack.c.b16 %v1161, %v1160
        %v1167 = vpack.c.b16 %v1163, %v1162
        %1168 = vrot.lane.b32.xlu0 %v1164, 64
        %v1169 = vpop.permute.xlu0 %1168
        %1170 = vrot.lane.b32.xlu0 %v1165, 64
        %v1171 = vpop.permute.xlu0 %1170
        %1172 = vrot.lane.b32.xlu0 %v1166, 64
        %v1173 = vpop.permute.xlu0 %1172
        %1174 = vrot.lane.b32.xlu0 %v1167, 64
        %v1175 = vpop.permute.xlu0 %1174
        %v1176 = vunpack.c.l.b16 %v880
        %v1177 = vunpack.c.l.b16 %v893
        %v1178 = vunpack.c.l.b16 %v906
        %v1179 = vunpack.c.l.b16 %v919
        %v1180 = vunpack.c.l.b16 %v932
        %v1181 = vunpack.c.l.b16 %v945
        %v1182 = vunpack.c.l.b16 %v958
        %v1183 = vunpack.c.l.b16 %v971
        %v1184 = vpack.c.b16 %v1177, %v1176
        %v1185 = vpack.c.b16 %v1179, %v1178
        %v1186 = vpack.c.b16 %v1181, %v1180
        %v1187 = vpack.c.b16 %v1183, %v1182
        %1188 = vrot.lane.b32.xlu0 %v1184, 96
        %v1189 = vpop.permute.xlu0 %1188
        %1190 = vrot.lane.b32.xlu0 %v1185, 96
        %v1191 = vpop.permute.xlu0 %1190
        %1192 = vrot.lane.b32.xlu0 %v1186, 96
        %v1193 = vpop.permute.xlu0 %1192
        %1194 = vrot.lane.b32.xlu0 %v1187, 96
        %v1195 = vpop.permute.xlu0 %1194
        %v1204 = vunpack.c.l.b16 %v972
        %v1205 = vunpack.c.l.b16 %v973
        %v1206 = vunpack.c.l.b16 %v974
        %v1207 = vunpack.c.l.b16 %v975
        %v1208 = vunpack.c.l.b16 %v976
        %v1209 = vunpack.c.l.b16 %v977
        %v1210 = vunpack.c.l.b16 %v978
        %v1211 = vunpack.c.l.b16 %v979
        %v1212 = vpack.c.b16 %v1205, %v1204
        %v1213 = vpack.c.b16 %v1207, %v1206
        %v1214 = vpack.c.b16 %v1209, %v1208
        %v1215 = vpack.c.b16 %v1211, %v1210
        %v1224 = vunpack.c.l.b16 %v853
        %v1225 = vunpack.c.l.b16 %v855
        %v1226 = vunpack.c.l.b16 %v857
        %v1227 = vunpack.c.l.b16 %v859
        %v1228 = vunpack.c.l.b16 %v861
        %v1229 = vunpack.c.l.b16 %v863
        %v1230 = vunpack.c.l.b16 %v865
        %v1231 = vunpack.c.l.b16 %v867
        %v1232 = vpack.c.b16 %v1225, %v1224
        %v1233 = vpack.c.b16 %v1227, %v1226
        %v1234 = vpack.c.b16 %v1229, %v1228
        %v1235 = vpack.c.b16 %v1231, %v1230
        %1236 = vrot.lane.b32.xlu0 %v1232, 32
        %v1237 = vpop.permute.xlu0 %1236
        %1238 = vrot.lane.b32.xlu0 %v1233, 32
        %v1239 = vpop.permute.xlu0 %1238
        %1240 = vrot.lane.b32.xlu0 %v1234, 32
        %v1241 = vpop.permute.xlu0 %1240
        %1242 = vrot.lane.b32.xlu0 %v1235, 32
        %v1243 = vpop.permute.xlu0 %1242
        %v1244 = vunpack.c.l.b16 %v1008
        %v1245 = vunpack.c.l.b16 %v1021
        %v1246 = vunpack.c.l.b16 %v1034
        %v1247 = vunpack.c.l.b16 %v1047
        %v1248 = vunpack.c.l.b16 %v1060
        %v1249 = vunpack.c.l.b16 %v1073
        %v1250 = vunpack.c.l.b16 %v1086
        %v1251 = vunpack.c.l.b16 %v1099
        %v1252 = vpack.c.b16 %v1245, %v1244
        %v1253 = vpack.c.b16 %v1247, %v1246
        %v1254 = vpack.c.b16 %v1249, %v1248
        %v1255 = vpack.c.b16 %v1251, %v1250
        %1256 = vrot.lane.b32.xlu0 %v1252, 64
        %v1257 = vpop.permute.xlu0 %1256
        %1258 = vrot.lane.b32.xlu0 %v1253, 64
        %v1259 = vpop.permute.xlu0 %1258
        %1260 = vrot.lane.b32.xlu0 %v1254, 64
        %v1261 = vpop.permute.xlu0 %1260
        %1262 = vrot.lane.b32.xlu0 %v1255, 64
        %v1263 = vpop.permute.xlu0 %1262
        %v1272 = vunpack.c.l.b16 %v1100
        %v1273 = vunpack.c.l.b16 %v1101
        %v1274 = vunpack.c.l.b16 %v1102
        %v1275 = vunpack.c.l.b16 %v1103
        %v1276 = vunpack.c.l.b16 %v1104
        %v1277 = vunpack.c.l.b16 %v1105
        %v1278 = vunpack.c.l.b16 %v1106
        %v1279 = vunpack.c.l.b16 %v1107
        %v1280 = vpack.c.b16 %v1273, %v1272
        %v1281 = vpack.c.b16 %v1275, %v1274
        %v1282 = vpack.c.b16 %v1277, %v1276
        %v1283 = vpack.c.b16 %v1279, %v1278
        %1284 = vrot.lane.b32.xlu0 %v1280, 96
        %v1285 = vpop.permute.xlu0 %1284
        %1286 = vrot.lane.b32.xlu0 %v1281, 96
        %v1287 = vpop.permute.xlu0 %1286
        %1288 = vrot.lane.b32.xlu0 %v1282, 96
        %v1289 = vpop.permute.xlu0 %1288
        %1290 = vrot.lane.b32.xlu0 %v1283, 96
        %v1291 = vpop.permute.xlu0 %1290
        %v1300 = vunpack.c.l.b16 %v981
        %v1301 = vunpack.c.l.b16 %v983
        %v1302 = vunpack.c.l.b16 %v985
        %v1303 = vunpack.c.l.b16 %v987
        %v1304 = vunpack.c.l.b16 %v989
        %v1305 = vunpack.c.l.b16 %v991
        %v1306 = vunpack.c.l.b16 %v993
        %v1307 = vunpack.c.l.b16 %v995
        %v1308 = vpack.c.b16 %v1301, %v1300
        %v1309 = vpack.c.b16 %v1303, %v1302
        %v1310 = vpack.c.b16 %v1305, %v1304
        %v1311 = vpack.c.b16 %v1307, %v1306
        %v1314 = vsel %vm409, %v1116, %v1141
        %v1317 = vsel %vm409, %v1117, %v1143
        %v1320 = vsel %vm409, %v1118, %v1145
        %v1323 = vsel %vm409, %v1119, %v1147
        %vm1324 = vcmask 523264
        %v1326 = vsel %vm1324, %v1314, %v1169
        %v1328 = vsel %vm1324, %v1317, %v1171
        %v1330 = vsel %vm1324, %v1320, %v1173
        %v1332 = vsel %vm1324, %v1323, %v1175
        %vm1333 = vcmask 785408
        %v1335 = vsel %vm1333, %v1326, %v1189
        %v1338 = vsel %vm1333, %v1328, %v1191
        %v1341 = vsel %vm1333, %v1330, %v1193
        %v1344 = vsel %vm1333, %v1332, %v1195
        %v1348 = vsel %vm409, %v1212, %v1237
        %v1351 = vsel %vm409, %v1213, %v1239
        %v1354 = vsel %vm409, %v1214, %v1241
        %v1357 = vsel %vm409, %v1215, %v1243
        %v1359 = vsel %vm1324, %v1348, %v1257
        %v1361 = vsel %vm1324, %v1351, %v1259
        %v1363 = vsel %vm1324, %v1354, %v1261
        %v1365 = vsel %vm1324, %v1357, %v1263
        %v1367 = vsel %vm1333, %v1359, %v1285
        %v1370 = vsel %vm1333, %v1361, %v1287
        %v1373 = vsel %vm1333, %v1363, %v1289
        %v1376 = vsel %vm1333, %v1365, %v1291
        %v1378 = vld [vmem:[%s3] sm:$0xf]
        %v1379 = vld [vmem:[%s3 + $0x4] sm:$0xf]
        %v1380 = vld [vmem:[%s3 + $0x8] sm:$0xf]
        %v1381 = vld [vmem:[%s3 + $0xc] sm:$0xf]
        %v1382 = vld [vmem:[%s3 + $0x10] sm:$0xf]
        %v1383 = vld [vmem:[%s3 + $0x14] sm:$0xf]
        %v1384 = vld [vmem:[%s3 + $0x18] sm:$0xf]
        %v1385 = vld [vmem:[%s3 + $0x1c] sm:$0xf]
        %v1386 = vld [vmem:[%s3 + $0x20] sm:$0xf]
        %v1387 = vld [vmem:[%s3 + $0x24] sm:$0xf]
        %v1388 = vld [vmem:[%s3 + $0x28] sm:$0xf]
        %v1389 = vld [vmem:[%s3 + $0x2c] sm:$0xf]
        %v1390 = vld [vmem:[%s3 + $0x30] sm:$0xf]
        %v1391 = vld [vmem:[%s3 + $0x34] sm:$0xf]
        %v1392 = vld [vmem:[%s3 + $0x38] sm:$0xf]
        %v1393 = vld [vmem:[%s3 + $0x3c] sm:$0xf]
        %v1394 = vld [vmem:[%s3 + $0x40] sm:$0xf]
        %v1395 = vld [vmem:[%s3 + $0x44] sm:$0xf]
        %v1396 = vld [vmem:[%s3 + $0x48] sm:$0xf]
        %v1397 = vld [vmem:[%s3 + $0x4c] sm:$0xf]
        %v1398 = vld [vmem:[%s3 + $0x50] sm:$0xf]
        %v1399 = vld [vmem:[%s3 + $0x54] sm:$0xf]
        %v1400 = vld [vmem:[%s3 + $0x58] sm:$0xf]
        %v1401 = vld [vmem:[%s3 + $0x5c] sm:$0xf]
        %v1402 = vld [vmem:[%s3 + $0x60] sm:$0xf]
        %v1403 = vld [vmem:[%s3 + $0x64] sm:$0xf]
        %v1404 = vld [vmem:[%s3 + $0x68] sm:$0xf]
        %v1405 = vld [vmem:[%s3 + $0x6c] sm:$0xf]
        %v1406 = vld [vmem:[%s3 + $0x70] sm:$0xf]
        %v1407 = vld [vmem:[%s3 + $0x74] sm:$0xf]
        %v1408 = vld [vmem:[%s3 + $0x78] sm:$0xf]
        %v1409 = vld [vmem:[%s3 + $0x7c] sm:$0xf]
        %v1410 = vld [vmem:[%s3 + $0x80] sm:$0xf]
        %v1411 = vld [vmem:[%s3 + $0x84] sm:$0xf]
        %v1412 = vld [vmem:[%s3 + $0x88] sm:$0xf]
        %v1413 = vld [vmem:[%s3 + $0x8c] sm:$0xf]
        %v1414 = vld [vmem:[%s4] sm:$0x1]
        %v1416 = vperm.slane %v1414, 0
        %v1454 = vunpack.c.l.b16 %v1378
        %v1455 = vunpack.c.l.b16 %v1379
        %v1456 = vunpack.c.l.b16 %v1380
        %v1457 = vunpack.c.l.b16 %v1381
        %v1458 = vunpack.c.l.b16 %v1382
        %v1459 = vunpack.c.l.b16 %v1383
        %v1460 = vunpack.c.l.b16 %v1384
        %v1461 = vunpack.c.l.b16 %v1385
        %v1462 = vunpack.c.l.b16 %v1386
        %v1463 = vunpack.c.l.b16 %v1387
        %v1464 = vunpack.c.l.b16 %v1388
        %v1465 = vunpack.c.l.b16 %v1389
        %v1466 = vunpack.c.l.b16 %v1390
        %v1467 = vunpack.c.l.b16 %v1391
        %v1468 = vunpack.c.l.b16 %v1392
        %v1469 = vunpack.c.l.b16 %v1393
        %v1470 = vunpack.c.l.b16 %v1394
        %v1471 = vunpack.c.l.b16 %v1395
        %v1472 = vunpack.c.l.b16 %v1396
        %v1473 = vunpack.c.l.b16 %v1397
        %v1474 = vunpack.c.l.b16 %v1398
        %v1475 = vunpack.c.l.b16 %v1399
        %v1476 = vunpack.c.l.b16 %v1400
        %v1477 = vunpack.c.l.b16 %v1401
        %v1478 = vunpack.c.l.b16 %v1402
        %v1479 = vunpack.c.l.b16 %v1403
        %v1480 = vunpack.c.l.b16 %v1404
        %v1481 = vunpack.c.l.b16 %v1405
        %v1482 = vunpack.c.l.b16 %v1406
        %v1483 = vunpack.c.l.b16 %v1407
        %v1484 = vunpack.c.l.b16 %v1408
        %v1485 = vunpack.c.l.b16 %v1409
        %v1486 = vunpack.c.l.b16 %v1410
        %v1487 = vunpack.c.l.b16 %v1411
        %v1488 = vunpack.c.l.b16 %v1412
        %v1489 = vunpack.c.l.b16 %v1413
        %v1490 = vpack.c.b16 %v1455, %v1454
        %v1491 = vpack.c.b16 %v1457, %v1456
        %v1492 = vpack.c.b16 %v1459, %v1458
        %v1493 = vpack.c.b16 %v1461, %v1460
        %v1494 = vpack.c.b16 %v1463, %v1462
        %v1495 = vpack.c.b16 %v1465, %v1464
        %v1496 = vpack.c.b16 %v1467, %v1466
        %v1497 = vpack.c.b16 %v1469, %v1468
        %v1498 = vpack.c.b16 %v1471, %v1470
        %v1499 = vpack.c.b16 %v1473, %v1472
        %v1500 = vpack.c.b16 %v1475, %v1474
        %v1501 = vpack.c.b16 %v1477, %v1476
        %v1502 = vpack.c.b16 %v1479, %v1478
        %v1503 = vpack.c.b16 %v1481, %v1480
        %v1504 = vpack.c.b16 %v1483, %v1482
        %v1505 = vpack.c.b16 %v1485, %v1484
        %v1506 = vpack.c.b16 %v1487, %v1486
        %v1507 = vpack.c.b16 %v1489, %v1488
        %v1527 = vsel %vm409, %v1308, 0
        %v1530 = vsel %vm409, %v1309, 0
        %v1533 = vsel %vm409, %v1310, 0
        %v1536 = vsel %vm409, %v1311, 0
        %1538 = vmatpush.bf16.msra.mxu0 %v1497
        %1539 = vmatpush.bf16.msra.mxu0 %v1496
        %1540 = vmatpush.bf16.msra.mxu0 %v1495
        %1541 = vmatpush.bf16.msra.mxu0 %v1494
        %1542 = vmatpush.bf16.msra.mxu0 %v1493
        %1543 = vmatpush.bf16.msra.mxu0 %v1492
        %1544 = vmatpush.bf16.msra.mxu0 %v1491
        %1545 = vmatpush.bf16.msra.mxu0 %v1490
        %1546 = vmatmul.bf16.gmra.mxu0 %v1335
        %v1547 = vpop.f32.mrf.mxu0
        %v1548 = vadd.f32 %v1416, %v1547
        %v1549 = vpop.f32.mrf.mxu0
        %v1550 = vadd.f32 %v1416, %v1549
        %1551 = vmatmul.bf16.gmra.mxu0 %v1338
        %v1552 = vpop.f32.mrf.mxu0
        %v1553 = vadd.f32 %v1416, %v1552
        %v1554 = vpop.f32.mrf.mxu0
        %v1555 = vadd.f32 %v1416, %v1554
        %1556 = vmatmul.bf16.gmra.mxu0 %v1341
        %v1557 = vpop.f32.mrf.mxu0
        %v1558 = vadd.f32 %v1416, %v1557
        %v1559 = vpop.f32.mrf.mxu0
        %v1560 = vadd.f32 %v1416, %v1559
        %1561 = vmatmul.bf16.gmra.mxu0 %v1344
        %v1562 = vpop.f32.mrf.mxu0
        %v1563 = vadd.f32 %v1416, %v1562
        %v1564 = vpop.f32.mrf.mxu0
        %v1565 = vadd.f32 %v1416, %v1564
        %1566 = vdwg.mxu0
        %1567 = vmatpush.bf16.msra.mxu0 %v1505
        %1568 = vmatpush.bf16.msra.mxu0 %v1504
        %1569 = vmatpush.bf16.msra.mxu0 %v1503
        %1570 = vmatpush.bf16.msra.mxu0 %v1502
        %1571 = vmatpush.bf16.msra.mxu0 %v1501
        %1572 = vmatpush.bf16.msra.mxu0 %v1500
        %1573 = vmatpush.bf16.msra.mxu0 %v1499
        %1574 = vmatpush.bf16.msra.mxu0 %v1498
        %1575 = vmatmul.bf16.gmra.mxu0 %v1367
        %v1576 = vpop.f32.mrf.mxu0
        %v1577 = vadd.f32 %v1548, %v1576
        %v1578 = vpop.f32.mrf.mxu0
        %v1579 = vadd.f32 %v1550, %v1578
        %1580 = vmatmul.bf16.gmra.mxu0 %v1370
        %v1581 = vpop.f32.mrf.mxu0
        %v1582 = vadd.f32 %v1553, %v1581
        %v1583 = vpop.f32.mrf.mxu0
        %v1584 = vadd.f32 %v1555, %v1583
        %1585 = vmatmul.bf16.gmra.mxu0 %v1373
        %v1586 = vpop.f32.mrf.mxu0
        %v1587 = vadd.f32 %v1558, %v1586
        %v1588 = vpop.f32.mrf.mxu0
        %v1589 = vadd.f32 %v1560, %v1588
        %1590 = vmatmul.bf16.gmra.mxu0 %v1376
        %v1591 = vpop.f32.mrf.mxu0
        %v1592 = vadd.f32 %v1563, %v1591
        %v1593 = vpop.f32.mrf.mxu0
        %v1594 = vadd.f32 %v1565, %v1593
        %1595 = vdwg.mxu0
        %1596 = vmatpush.bf16.msra.mxu0 0
        %1597 = vmatpush.bf16.msra.mxu0 0
        %1598 = vmatpush.bf16.msra.mxu0 0
        %1599 = vmatpush.bf16.msra.mxu0 0
        %1600 = vmatpush.bf16.msra.mxu0 0
        %1601 = vmatpush.bf16.msra.mxu0 0
        %1602 = vmatpush.bf16.msra.mxu0 %v1507
        %1603 = vmatpush.bf16.msra.mxu0 %v1506
        %1604 = vmatmul.bf16.gmra.mxu0 %v1527
        %v1605 = vpop.f32.mrf.mxu0
        %v1606 = vadd.f32 %v1577, %v1605
        %v1607 = vpop.f32.mrf.mxu0
        %v1608 = vadd.f32 %v1579, %v1607
        %1609 = vmatmul.bf16.gmra.mxu0 %v1530
        %v1610 = vpop.f32.mrf.mxu0
        %v1611 = vadd.f32 %v1582, %v1610
        %v1612 = vpop.f32.mrf.mxu0
        %v1613 = vadd.f32 %v1584, %v1612
        %1614 = vmatmul.bf16.gmra.mxu0 %v1533
        %v1615 = vpop.f32.mrf.mxu0
        %v1616 = vadd.f32 %v1587, %v1615
        %v1617 = vpop.f32.mrf.mxu0
        %v1618 = vadd.f32 %v1589, %v1617
        %1619 = vmatmul.bf16.gmra.mxu0 %v1536
        %v1620 = vpop.f32.mrf.mxu0
        %v1621 = vadd.f32 %v1592, %v1620
        %v1622 = vpop.f32.mrf.mxu0
        %v1623 = vadd.f32 %v1594, %v1622
        %1624 = vdwg.mxu0
        %v1625 = vmax.f32 %v1606, 0.0
        %v1626 = vmax.f32 %v1608, 0.0
        %v1627 = vmax.f32 %v1611, 0.0
        %v1628 = vmax.f32 %v1613, 0.0
        %v1629 = vmax.f32 %v1616, 0.0
        %v1630 = vmax.f32 %v1618, 0.0
        %v1631 = vmax.f32 %v1621, 0.0
        %v1632 = vmax.f32 %v1623, 0.0
        %v1633 = vsel %vm1324, %v1625, -inf
        %v1634 = vsel %vm1324, %v1626, -inf
        %v1635 = vsel %vm1324, %v1627, -inf
        %v1636 = vsel %vm1324, %v1628, -inf
        %v1637 = vsel %vm1324, %v1629, -inf
        %v1638 = vmax.f32 %v1633, %v1637
        %v1639 = vsel %vm1324, %v1630, -inf
        %v1640 = vmax.f32 %v1634, %v1639
        %v1641 = vsel %vm1324, %v1631, -inf
        %v1642 = vmax.f32 %v1635, %v1641
        %v1643 = vsel %vm1324, %v1632, -inf
        %v1644 = vmax.f32 %v1636, %v1643
        %v1645 = vmax.f32 %v1638, %v1640
        %v1646 = vmax.f32 %v1642, %v1644
        %v1647 = vmax.f32 %v1645, %v1646
        %v1648 = vrot.slane %v1647, 4
        %v1649 = vmax.f32 %v1647, %v1648
        %v1650 = vrot.slane %v1649, 2
        %v1651 = vmax.f32 %v1649, %v1650
        %v1652 = vrot.slane %v1651, 1
        %v1653 = vmax.f32 %v1651, %v1652
        %v1654 = vpack.c.bf16 %v1653, %v1653
        %v1655 = vld [vmem:[%s5] sm:$0xf]
        %v1656 = vld [vmem:[%s5 + $0x4] sm:$0xf]
        %v1657 = vld [vmem:[%s5 + $0x8] sm:$0xf]
        %v1658 = vld [vmem:[%s5 + $0xc] sm:$0xf]
        %v1659 = vld [vmem:[%s5 + $0x10] sm:$0xf]
        %v1660 = vld [vmem:[%s5 + $0x14] sm:$0xf]
        %v1661 = vld [vmem:[%s5 + $0x18] sm:$0xf]
        %v1662 = vld [vmem:[%s5 + $0x1c] sm:$0xf]
        %v1663 = vld [vmem:[%s6] sm:$0x1]
        %v1672 = vunpack.c.l.b16 %v1655
        %v1673 = vunpack.c.l.b16 %v1656
        %v1674 = vunpack.c.l.b16 %v1657
        %v1675 = vunpack.c.l.b16 %v1658
        %v1676 = vunpack.c.l.b16 %v1659
        %v1677 = vunpack.c.l.b16 %v1660
        %v1678 = vunpack.c.l.b16 %v1661
        %v1679 = vunpack.c.l.b16 %v1662
        %v1680 = vpack.c.b16 %v1673, %v1672
        %v1681 = vpack.c.b16 %v1675, %v1674
        %v1682 = vpack.c.b16 %v1677, %v1676
        %v1683 = vpack.c.b16 %v1679, %v1678
        %v1689 = vsel %vm1324, %v1654, 0
        %1691 = vmatpush.bf16.msra.mxu0 0
        %1692 = vmatpush.bf16.msra.mxu0 0
        %1693 = vmatpush.bf16.msra.mxu0 0
        %1694 = vmatpush.bf16.msra.mxu0 0
        %1695 = vmatpush.bf16.msra.mxu0 %v1683
        %1696 = vmatpush.bf16.msra.mxu0 %v1682
        %1697 = vmatpush.bf16.msra.mxu0 %v1681
        %1698 = vmatpush.bf16.msra.mxu0 %v1680
        %1699 = vmatmul.bf16.gmra.mxu0 %v1689
        %v1700 = vpop.f32.mrf.mxu0
        %v1701 = vadd.f32 %v1663, %v1700
        %v1702 = vpop.f32.mrf.mxu0
        %1703 = vdwg.mxu0
        %1704 = vst [vmem:[%s270] sm:$0x1] %v1701
        %s1705 = sand.u32 %s181, 1
        %s1706 = scalar_lea.sflag [#allocation4], %s1705
        %s1707 = sand.u32 %s181, 1
        %s1708 = scalar_lea.vmem [#allocation3], %s1707
        // Predicated region
        $region49: #{timmnet_forward.1} parent=47 // pred_check
          %p1709 = pneg %p191
        $region50: #{timmnet_forward.1} parent=47 // pred_check_branch
          %1711 = sbr.rel (%p1709) target = $region52
        $region51: #{timmnet_forward.1} parent=47 // pred_region
          %1713 = vsyncadd %s1706, 0
          %s1714 = scalar_lea.hbm %s7, %s21
          %s1716 = sshll.u32 %s1708, 4
          %s1717 = int_to_ptr.vmem [resolvable:$true] %s1716
          %s1718 = sshll.u32 %s1714, 4
          %s1719 = int_to_ptr.hbm [resolvable:$true] %s1718
          %1721 = dma.vmem_to_hbm [thread:$0]  %s1717, 16, %s1719, %s1706
        $region52: #{timmnet_forward.1} parent=47 // pred_fallthru
          _
      $region48: #{timmnet_forward.1} parent=5 // pred_fallthru
        _
      %p1722 = scmp.le.s32.totalorder 2, %s16
      // Predicated region
      $region53: #{timmnet_forward.1} parent=5 // pred_check
        %p1723 = pneg %p1722
      $region54: #{timmnet_forward.1} parent=5 // pred_check_branch
        %1725 = sbr.rel (%p1723) target = $region56
      $region55: #{timmnet_forward.1} parent=5 // pred_region
        %s1726 = ssub.s32 %s16, 2
        // Predicated region
        $region57: #{timmnet_forward.1} parent=55 // pred_check
          %p1727 = pneg %p197
        $region58: #{timmnet_forward.1} parent=55 // pred_check_branch
          %1729 = sbr.rel (%p1727) target = $region60
        $region59: #{timmnet_forward.1} parent=55 // pred_region
          %s1730 = sand.u32 %s182, 1
          %s1731 = scalar_lea.sflag [#allocation4], %s1730
          %s1732 = sand.u32 %s182, 1
          %s1733 = scalar_lea.vmem [#allocation3], %s1732
          %1735 = dma.done %s1731, 16
        $region60: #{timmnet_forward.1} parent=55 // pred_fallthru
          _
      $region56: #{timmnet_forward.1} parent=5 // pred_fallthru
        _
    $region6: #{timmnet_forward.1} parent=1 // loop_footer
      %s20 = sadd.s32 1, %s16
    $region7: #{timmnet_forward.1} parent=1 // loop_footer_branch
      %15 = sbr.rel target = $region3
    $region8: #{timmnet_forward.1} parent=1 // loop_exit
      _
    %1736 = vsyncpa [#allocation4], 1
    %s1737 = scalar_lea.sflag [#allocation4], 1
    %1738 = vsyncpa %s1737, 1

</llo_original>
